<compile_context>
chip_gen: v7x
topology: tpu7x:2x2x1
jax: 0.10.0
libtpu: 0.0.40
codegen_flags: <defaults>
</compile_context>

<pallas_src>
import functools

import jax
import jax.numpy as jnp
from jax.experimental import pallas as pl
from jax.experimental.pallas import tpu as pltpu

_LANE = 128


def _round_up(x, m):
    return (x + m - 1) // m * m


def frame_attention_kernel(x_ref, w1f_ref, b1_ref, wout_ref, bout_ref,
                           out_ref, *, i_pad, apply_sigmoid):
    # f32 activations in VMEM; cast to bf16 on the VPU right before the MXU.
    x = x_ref[...].astype(jnp.bfloat16)                              # [TB, K]

    # h1 = relu([desc_flat | hidden] @ [Wc ; W1b] + b1)   (one MXU pass, f32 acc)
    acc = (jnp.dot(x, w1f_ref[...], preferred_element_type=jnp.float32)
           + b1_ref[...])
    h1 = jnp.maximum(acc, 0.0)                                       # f32 (VPU)

    # Fused [w2 | v] projection: one MXU pass, lane-dense [TB, i_pad + nd_pad].
    out = (jnp.dot(h1.astype(wout_ref.dtype), wout_ref[...],
                   preferred_element_type=jnp.float32)
           + bout_ref[...])

    nxt = jnp.maximum(out[:, :i_pad], 0.0)                           # relu(w2(x))
    a = out[:, i_pad:]                                               # v(x)
    if apply_sigmoid:   # PyTorch applies sigmoid only in eval mode
        a = jax.nn.sigmoid(a)

    # Single fused output buffer, two 128-aligned dense stores, one writeback.
    out_ref[:, :i_pad] = nxt
    out_ref[:, i_pad:] = a


def prepare_params(params, *, num_descriptors, hidden_size, input_size):
    """Fold / fuse / cast the raw (pre-transposed) params once; cache result."""
    ND, I, H = num_descriptors, input_size, hidden_size
    wd, bd = params["wd"], params["bd"]            # [DS, I], [1, I]
    w1, b1 = params["w1"], params["b1"]            # [SA, SA], [1, SA]
    w2, b2 = params["w2"], params["b2"]            # [SA, I], [1, I]
    wv, bv = params["wv"], params["bv"]            # [SA, ND], [1, ND]
    DS = wd.shape[0]
    SA = ND * I + H
    K = ND * DS + H

    w1a = w1[:ND * I].reshape(ND, I, SA)           # rows multiplying flatten(embedded)
    w1b = w1[ND * I:]                              # rows multiplying hidden_state

    # flatten(desc_to_input(desc)) @ w1a  ==  desc_flat @ Wc + (sum_n bd @ w1a[n])
    wc = jnp.einsum("di,nis->nds", wd, w1a).reshape(ND * DS, SA)
    b1_eff = b1 + jnp.einsum("i,nis->s", bd[0], w1a)[None, :]

    # Fuse the two K-matmuls into one: [desc_flat | hidden] @ [Wc ; W1b].
    w1f = jnp.concatenate([wc, w1b], axis=0)       # [K, SA]

    # Fuse w2 and v, lane-padded so stores are dense multiples of 128.
    i_pad = _round_up(I, _LANE)
    nd_pad = _round_up(ND, _LANE)
    wout = jnp.concatenate([jnp.pad(w2, ((0, 0), (0, i_pad - I))),
                            jnp.pad(wv, ((0, 0), (0, nd_pad - ND)))], axis=1)
    bout = jnp.concatenate([jnp.pad(b2, ((0, 0), (0, i_pad - I))),
                            jnp.pad(bv, ((0, 0), (0, nd_pad - ND)))], axis=1)

    return dict(
        w1f=w1f.astype(jnp.bfloat16),      # [K, SA]
        b1=b1_eff.astype(jnp.float32),     # [1, SA]  (bd folded in)
        wout=wout.astype(jnp.bfloat16),    # [SA, i_pad + nd_pad]
        bout=bout.astype(jnp.float32),     # [1, i_pad + nd_pad]
        nd=ND, ds=DS, i=I, h=H, sa=SA, k=K, i_pad=i_pad, nd_pad=nd_pad)


def _pick_batch_tile(B, batch_tile):
    """grid >= 2 whenever B > 128 (v7x megacore), big tiles for big B (v6e/v7x)."""
    if batch_tile is not None:
        return batch_tile
    if B <= 128:
        return B            # single grid step, block == full array dims
    if B <= 256:
        return 128          # grid 2
    if B <= 512:
        return 256          # grid 2 (with padding)
    return 512              # grid >= 2, amortizes per-step overhead


def frame_attention(descriptors, hidden_state, prev_attention, prepared,
                    *, training=False, batch_tile=None):
    """Returns (a, next_input) exactly like FrameAttention.forward."""
    # prev_attention is accepted for API parity but (as in the PyTorch forward)
    # is never used.
    del prev_attention
    B, ND, DS = descriptors.shape
    H = hidden_state.shape[-1]
    I, SA, K = prepared["i"], prepared["sa"], prepared["k"]
    i_pad, nd_pad = prepared["i_pad"], prepared["nd_pad"]
    out_cols = i_pad + nd_pad
    assert K == ND * DS + H

    # Single f32 activation [B, ND*DS + H]; the bf16 cast happens in-kernel.
    x = jnp.concatenate([descriptors.reshape(B, ND * DS), hidden_state], axis=-1)

    TB = _pick_batch_tile(B, batch_tile)
    B_pad = _round_up(B, TB)
    if B_pad != B:
        # Zero-pad the batch instead of putting a non-divisible B in one tile
        # (keeps TB bounded, preserves pipelining / megacore sharding).
        x = jnp.pad(x, ((0, B_pad - B), (0, 0)))
    grid = (B_pad // TB,)

    kernel = functools.partial(frame_attention_kernel,
                               i_pad=i_pad, apply_sigmoid=not training)

    in_specs = [
        pl.BlockSpec((TB, K),        lambda i: (i, 0)),      # fused f32 activation
        pl.BlockSpec((K, SA),        lambda i: (0, 0)),      # [Wc ; W1b] fused (bf16)
        pl.BlockSpec((1, SA),        lambda i: (0, 0)),      # b1 (bd folded in)
        pl.BlockSpec((SA, out_cols), lambda i: (0, 0)),      # [w2 | v] fused (bf16)
        pl.BlockSpec((1, out_cols),  lambda i: (0, 0)),      # [b2 | bv] fused
    ]
    out_specs = pl.BlockSpec((TB, out_cols), lambda i: (i, 0))   # [next | a] fused
    out_shape = jax.ShapeDtypeStruct((B_pad, out_cols), jnp.float32)

    flops = 2 * B_pad * (K * SA + SA * out_cols)
    transcendentals = 0 if training else B * ND
    bytes_accessed = (
        B_pad * K * 4                               # f32 activation in
        + K * SA * 2 + SA * 4                       # fused w1 (bf16), b1 (f32)
        + SA * out_cols * 2 + out_cols * 4          # wout (bf16), bout (f32)
        + B_pad * out_cols * 4)                     # fused f32 output

    out = pl.pallas_call(
        kernel,
        grid=grid,
        in_specs=in_specs,
        out_specs=out_specs,
        out_shape=out_shape,
        compiler_params=pltpu.CompilerParams(
            dimension_semantics=("parallel",),
            vmem_limit_bytes=32 << 20),
        cost_estimate=pl.CostEstimate(flops=int(flops),
                                      transcendentals=int(transcendentals),
                                      bytes_accessed=int(bytes_accessed)),
    )(x, prepared["w1f"], prepared["b1"], prepared["wout"], prepared["bout"])

    next_input = out[:B, :I]
    a = out[:B, i_pad:i_pad + ND]
    return a, next_input


def init_params(key, num_descriptors, hidden_size, input_size, descriptor_size):
    """Deterministic PyTorch-style (uniform +-1/sqrt(fan_in)) init, pre-transposed."""
    SA = input_size * num_descriptors + hidden_size
    ks = jax.random.split(key, 8)

    def linear(kw, kb, fan_in, fan_out):
        bound = 1.0 / float(fan_in) ** 0.5
        w = jax.random.uniform(kw, (fan_in, fan_out), jnp.float32, -bound, bound)
        b = jax.random.uniform(kb, (1, fan_out), jnp.float32, -bound, bound)
        return w, b

    wd, bd = linear(ks[0], ks[1], descriptor_size, input_size)       # desc_to_input
    w1, b1 = linear(ks[2], ks[3], SA, SA)                            # w1
    w2, b2 = linear(ks[4], ks[5], SA, input_size)                    # w2
    wv, bv = linear(ks[6], ks[7], SA, num_descriptors)               # v
    return dict(wd=wd, bd=bd, w1=w1, b1=b1, w2=w2, b2=b2, wv=wv, bv=bv)


def frame_attention_reference(descriptors, hidden_state, params, *, training=False):
    """Pure-JAX mirror of the PyTorch forward (for correctness check)."""
    emb = descriptors @ params["wd"] + params["bd"]                  # [B, ND, I]
    x = emb.reshape(emb.shape[0], emb.shape[1] * emb.shape[2])
    x = jnp.concatenate([x, hidden_state], axis=-1)
    h1 = jax.nn.relu(x @ params["w1"] + params["b1"])
    nxt = jax.nn.relu(h1 @ params["w2"] + params["b2"])
    a = h1 @ params["wv"] + params["bv"]
    if not training:
        a = jax.nn.sigmoid(a)
    return a, nxt


if __name__ == "__main__":
    # Small shapes consistent with the module's forward.
    B, ND, DS, I, H = 16, 8, 8, 128, 128   # batch, num_descriptors, descriptor_size, input_size, hidden_size

    key = jax.random.PRNGKey(0)
    kp, kd, kh, ka = jax.random.split(key, 4)
    params = init_params(kp, num_descriptors=ND, hidden_size=H,
                         input_size=I, descriptor_size=DS)
    prepared = prepare_params(params, num_descriptors=ND, hidden_size=H,
                              input_size=I)   # fold/fuse/bf16 once, reuse per step

    descriptors = jax.random.normal(kd, (B, ND, DS), jnp.float32)
    hidden_state = jax.random.normal(kh, (B, H), jnp.float32)
    prev_attention = jax.random.uniform(ka, (B, ND), jnp.float32)    # unused by forward

    a, next_input = frame_attention(descriptors, hidden_state, prev_attention,
                                    prepared, training=False)
    jax.block_until_ready((a, next_input))

    a_ref, nxt_ref = frame_attention_reference(descriptors, hidden_state, params,
                                               training=False)
    assert a.shape == (B, ND) and next_input.shape == (B, I)
    assert jnp.allclose(a, a_ref, atol=2e-2, rtol=2e-2)
    assert jnp.allclose(next_input, nxt_ref, atol=2e-2, rtol=2e-2)

    print("KERNEL_OK")
</pallas_src>

<mosaic_0001>
module attributes {stable_mosaic.version = 11 : i64} {
  func.func @frame_attention_kernel(%arg0: i32, %arg1: memref<16x192xf32, #tpu.memory_space<vmem>>, %arg2: memref<192x1152xbf16, #tpu.memory_space<vmem>>, %arg3: memref<1x1152xf32, #tpu.memory_space<vmem>>, %arg4: memref<1152x256xbf16, #tpu.memory_space<vmem>>, %arg5: memref<1x256xf32, #tpu.memory_space<vmem>>, %arg6: memref<16x256xf32, #tpu.memory_space<vmem>>) attributes {dimension_semantics = [#tpu.dimension_semantics<parallel>], iteration_bounds = array<i64: 1>, scalar_prefetch = 0 : i64, scratch_operands = 0 : i64, tpu.core_type = #tpu.core_type<tc>, window_params = [{transform_indices = @transform_0, window_bounds = array<i64: 16, 192>}, {pipeline_mode = #tpu.pipeline_mode<synchronous>, transform_indices = @transform_1, window_bounds = array<i64: 192, 1152>}, {pipeline_mode = #tpu.pipeline_mode<synchronous>, transform_indices = @transform_2, window_bounds = array<i64: 1, 1152>}, {pipeline_mode = #tpu.pipeline_mode<synchronous>, transform_indices = @transform_3, window_bounds = array<i64: 1152, 256>}, {pipeline_mode = #tpu.pipeline_mode<synchronous>, transform_indices = @transform_4, window_bounds = array<i64: 1, 256>}, {transform_indices = @transform_5, window_bounds = array<i64: 16, 256>}]} {
    %c0 = arith.constant 0 : index
    %c0_0 = arith.constant 0 : index
    %0 = vector.load %arg1[%c0, %c0_0] : memref<16x192xf32, #tpu.memory_space<vmem>>, vector<16x192xf32>
    %1 = arith.truncf %0 : vector<16x192xf32> to vector<16x192xbf16>
    %c0_1 = arith.constant 0 : index
    %c0_2 = arith.constant 0 : index
    %2 = vector.load %arg2[%c0_1, %c0_2] : memref<192x1152xbf16, #tpu.memory_space<vmem>>, vector<192x1152xbf16>
    %cst = arith.constant dense<0.000000e+00> : vector<16x1152xf32>
    %3 = tpu.matmul %1, %2, %cst {dimension_numbers = #tpu.dot_dimension_numbers<[1], [0], [0], [1], [0, 0, 1, 1], [], []>} : vector<16x192xbf16>, vector<192x1152xbf16>, vector<16x1152xf32> -> vector<16x1152xf32>
    %c0_3 = arith.constant 0 : index
    %c0_4 = arith.constant 0 : index
    %4 = vector.load %arg3[%c0_3, %c0_4] : memref<1x1152xf32, #tpu.memory_space<vmem>>, vector<1x1152xf32>
    %5 = vector.broadcast %4 : vector<1x1152xf32> to vector<16x1152xf32>
    %6 = arith.addf %3, %5 : vector<16x1152xf32>
    %cst_5 = arith.constant 0.000000e+00 : f32
    %7 = vector.broadcast %cst_5 : f32 to vector<16x1152xf32>
    %8 = arith.maximumf %6, %7 : vector<16x1152xf32>
    %9 = arith.truncf %8 : vector<16x1152xf32> to vector<16x1152xbf16>
    %c0_6 = arith.constant 0 : index
    %c0_7 = arith.constant 0 : index
    %10 = vector.load %arg4[%c0_6, %c0_7] : memref<1152x256xbf16, #tpu.memory_space<vmem>>, vector<1152x256xbf16>
    %cst_8 = arith.constant dense<0.000000e+00> : vector<16x256xf32>
    %11 = tpu.matmul %9, %10, %cst_8 {dimension_numbers = #tpu.dot_dimension_numbers<[1], [0], [0], [1], [0, 0, 1, 1], [], []>} : vector<16x1152xbf16>, vector<1152x256xbf16>, vector<16x256xf32> -> vector<16x256xf32>
    %c0_9 = arith.constant 0 : index
    %c0_10 = arith.constant 0 : index
    %12 = vector.load %arg5[%c0_9, %c0_10] : memref<1x256xf32, #tpu.memory_space<vmem>>, vector<1x256xf32>
    %13 = vector.broadcast %12 : vector<1x256xf32> to vector<16x256xf32>
    %14 = arith.addf %11, %13 : vector<16x256xf32>
    %15 = vector.extract_strided_slice %14 {offsets = [0, 0], sizes = [16, 128], strides = [1, 1]} : vector<16x256xf32> to vector<16x128xf32>
    %cst_11 = arith.constant 0.000000e+00 : f32
    %16 = vector.broadcast %cst_11 : f32 to vector<16x128xf32>
    %17 = arith.maximumf %15, %16 : vector<16x128xf32>
    %18 = vector.extract_strided_slice %14 {offsets = [0, 128], sizes = [16, 128], strides = [1, 1]} : vector<16x256xf32> to vector<16x128xf32>
    %19 = arith.negf %18 : vector<16x128xf32>
    %20 = math.exp %19 : vector<16x128xf32>
    %cst_12 = arith.constant 1.000000e+00 : f32
    %21 = vector.broadcast %cst_12 : f32 to vector<16x128xf32>
    %22 = arith.addf %21, %20 : vector<16x128xf32>
    %23 = arith.divf %21, %22 : vector<16x128xf32>
    %c0_13 = arith.constant 0 : index
    %c0_14 = arith.constant 0 : index
    %24 = vector.load %arg6[%c0_13, %c0_14] : memref<16x256xf32, #tpu.memory_space<vmem>>, vector<16x128xf32>
    tpu.vector_store %arg6[%c0_13, %c0_14], %17 {strides = array<i32>} : memref<16x256xf32, #tpu.memory_space<vmem>>, vector<16x128xf32>,
    %c0_15 = arith.constant 0 : index
    %c128 = arith.constant 128 : index
    %25 = vector.load %arg6[%c0_15, %c128] : memref<16x256xf32, #tpu.memory_space<vmem>>, vector<16x128xf32>
    tpu.vector_store %arg6[%c0_15, %c128], %23 {strides = array<i32>} : memref<16x256xf32, #tpu.memory_space<vmem>>, vector<16x128xf32>,
    return
  }
  func.func @transform_0(%arg0: i32) -> (i32, i32) {
    %c0_i32 = arith.constant 0 : i32
    %c0_i32_0 = arith.constant 0 : i32
    return %arg0, %c0_i32 : i32, i32
  }
  func.func @transform_1(%arg0: i32) -> (i32, i32) {
    %c0_i32 = arith.constant 0 : i32
    %c0_i32_0 = arith.constant 0 : i32
    %c0_i32_1 = arith.constant 0 : i32
    return %c0_i32, %c0_i32_0 : i32, i32
  }
  func.func @transform_2(%arg0: i32) -> (i32, i32) {
    %c0_i32 = arith.constant 0 : i32
    %c0_i32_0 = arith.constant 0 : i32
    %c0_i32_1 = arith.constant 0 : i32
    return %c0_i32, %c0_i32_0 : i32, i32
  }
  func.func @transform_3(%arg0: i32) -> (i32, i32) {
    %c0_i32 = arith.constant 0 : i32
    %c0_i32_0 = arith.constant 0 : i32
    %c0_i32_1 = arith.constant 0 : i32
    return %c0_i32, %c0_i32_0 : i32, i32
  }
  func.func @transform_4(%arg0: i32) -> (i32, i32) {
    %c0_i32 = arith.constant 0 : i32
    %c0_i32_0 = arith.constant 0 : i32
    %c0_i32_1 = arith.constant 0 : i32
    return %c0_i32, %c0_i32_0 : i32, i32
  }
  func.func @transform_5(%arg0: i32) -> (i32, i32) {
    %c0_i32 = arith.constant 0 : i32
    %c0_i32_0 = arith.constant 0 : i32
    return %arg0, %c0_i32 : i32, i32
  }
}

</mosaic_0001>

<llo_original>
// kernel: tpu_custom_call.1
$region0: #{tpu_custom_call.1}
  #allocation0 [shape = 'u32[]', space=smem, size = 0x4, offset = 0x4, fixed_abs, tag = 'smem constant byte address 0x4 - core index']
  #allocation1 [shape = 'u32[144,128]{1,0:T(1,128)}', space=vmem, size = 0x12000, scoped, tag = 'internal scratch']
  %s0 = inlined_call_operand.hbm [shape: f32[16,192], index: 0, kind: input, shape index: {}]
  %s1 = inlined_call_operand.hbm [shape: bf16[192,1152], index: 1, kind: input, shape index: {}]
  %s2 = inlined_call_operand.hbm [shape: f32[1,1152], index: 2, kind: input, shape index: {}]
  %s3 = inlined_call_operand.hbm [shape: bf16[1152,256], index: 3, kind: input, shape index: {}]
  %s4 = inlined_call_operand.vmem [shape: f32[1,256], index: 4, kind: input, shape index: {}]
  %s5 = inlined_call_operand.hbm [shape: f32[16,256], index: 5, kind: output, shape index: {}]
  %s6 = sld [smem:[#allocation0]]
  $region46: #{tpu_custom_call.1} parent=0
    _
  %s8 = ssub.s32 1, %s6
  %s9 = scalar_select 0, %s8, %s6
  $region1: #{tpu_custom_call.1} parent=0
    #allocation2 [shape = 'u8[16384]{0}', space=vmem, size = 0x4000, scoped, tag = 'input window, operand 0, single buffered']
    #allocation3 [shape = 's32[1]{0}', space=sflag, size = 0x4, scoped, tag = 'scoped memory for tpu_custom_call.1']
    #allocation4 [shape = 's32[1]{0}', space=sflag, size = 0x4, scoped, tag = 'scoped memory for tpu_custom_call.1']
    #allocation5 [shape = 'u8[442368]{0}', space=vmem, size = 0x6c000, scoped, tag = 'input window, operand 1, single buffered']
    #allocation6 [shape = 's32[1]{0}', space=sflag, size = 0x4, scoped, tag = 'scoped memory for tpu_custom_call.1']
    #allocation7 [shape = 'u8[4608]{0}', space=vmem, size = 0x1400, scoped, tag = 'input window, operand 2, single buffered']
    #allocation8 [shape = 'u8[589824]{0}', space=vmem, size = 0x90000, scoped, tag = 'input window, operand 3, single buffered']
    #allocation9 [shape = 's32[1]{0}', space=sflag, size = 0x4, scoped, tag = 'scoped memory for tpu_custom_call.1']
    #allocation10 [shape = 'u8[16384]{0}', space=vmem, size = 0x4000, scoped, tag = 'output window, operand 0, single buffered']
    %10 = vsyncpa [#allocation3], 0
    %11 = vsyncpa [#allocation6], 0
    %12 = vsyncpa [#allocation9], 0
    %13 = vsyncpa [#allocation4], 0
    // Predicated region
    $region2: #{tpu_custom_call.1} parent=1 // pred_check
      _
    $region3: #{tpu_custom_call.1} parent=1 // pred_check_branch
      %15 = sbr.rel (0) target = $region5
    $region4: #{tpu_custom_call.1} parent=1 // pred_region
      %s17 = ssub.s32 512, 512
      %18 = vsyncadd [#allocation3], %s17
      %s19 = sshll.u32 [#allocation2], 4
      %s20 = int_to_ptr.vmem [resolvable:$true] %s19
      %25 = dma.hbm_to_vmem [thread:$0]  %s0, 512, %s20, [#allocation3], 256, 256, 16
    $region5: #{tpu_custom_call.1} parent=1 // pred_fallthru
      _
    // Predicated region
    $region6: #{tpu_custom_call.1} parent=1 // pred_check
      _
    $region7: #{tpu_custom_call.1} parent=1 // pred_check_branch
      %27 = sbr.rel (0) target = $region9
    $region8: #{tpu_custom_call.1} parent=1 // pred_region
      %s29 = ssub.s32 13824, 13824
      %30 = vsyncadd [#allocation6], %s29
      %s31 = sshll.u32 [#allocation5], 4
      %s32 = int_to_ptr.vmem [resolvable:$true] %s31
      %37 = dma.hbm_to_vmem [thread:$0]  %s1, 13824, %s32, [#allocation6], 576, 576, 36
    $region9: #{tpu_custom_call.1} parent=1 // pred_fallthru
      _
    // Predicated region
    $region10: #{tpu_custom_call.1} parent=1 // pred_check
      _
    $region11: #{tpu_custom_call.1} parent=1 // pred_check_branch
      %39 = sbr.rel (0) target = $region13
    $region12: #{tpu_custom_call.1} parent=1 // pred_region
      %s41 = ssub.s32 144, 144
      %42 = vsyncadd [#allocation6], %s41
      %s44 = sshll.u32 [#allocation7], 4
      %s45 = int_to_ptr.vmem [resolvable:$true] %s44
      %47 = dma.hbm_to_vmem [thread:$0]  %s2, 144, %s45, [#allocation6]
    $region13: #{tpu_custom_call.1} parent=1 // pred_fallthru
      _
    // Predicated region
    $region14: #{tpu_custom_call.1} parent=1 // pred_check
      _
    $region15: #{tpu_custom_call.1} parent=1 // pred_check_branch
      %49 = sbr.rel (0) target = $region17
    $region16: #{tpu_custom_call.1} parent=1 // pred_region
      %s51 = ssub.s32 18432, 18432
      %52 = vsyncadd [#allocation9], %s51
      %s53 = sshll.u32 [#allocation8], 4
      %s54 = int_to_ptr.vmem [resolvable:$true] %s53
      %59 = dma.hbm_to_vmem [thread:$0]  %s3, 18432, %s54, [#allocation9], 128, 128, 8
    $region17: #{tpu_custom_call.1} parent=1 // pred_fallthru
      _
    // Predicated region
    $region18: #{tpu_custom_call.1} parent=1 // pred_check
      _
    $region19: #{tpu_custom_call.1} parent=1 // pred_check_branch
      %61 = sbr.rel (0) target = $region21
    $region20: #{tpu_custom_call.1} parent=1 // pred_region
      _
    $region21: #{tpu_custom_call.1} parent=1 // pred_fallthru
      _
    // Predicated region
    $region22: #{tpu_custom_call.1} parent=1 // pred_check
      _
    $region23: #{tpu_custom_call.1} parent=1 // pred_check_branch
      %63 = sbr.rel (0) target = $region25
    $region24: #{tpu_custom_call.1} parent=1 // pred_region
      %64 = dma.done [#allocation3], 512
    $region25: #{tpu_custom_call.1} parent=1 // pred_fallthru
      _
    // Predicated region
    $region26: #{tpu_custom_call.1} parent=1 // pred_check
      _
    $region27: #{tpu_custom_call.1} parent=1 // pred_check_branch
      %66 = sbr.rel (0) target = $region29
    $region28: #{tpu_custom_call.1} parent=1 // pred_region
      %67 = dma.done [#allocation6], 13824
    $region29: #{tpu_custom_call.1} parent=1 // pred_fallthru
      _
    // Predicated region
    $region30: #{tpu_custom_call.1} parent=1 // pred_check
      _
    $region31: #{tpu_custom_call.1} parent=1 // pred_check_branch
      %69 = sbr.rel (0) target = $region33
    $region32: #{tpu_custom_call.1} parent=1 // pred_region
      %70 = dma.done [#allocation6], 144
    $region33: #{tpu_custom_call.1} parent=1 // pred_fallthru
      _
    // Predicated region
    $region34: #{tpu_custom_call.1} parent=1 // pred_check
      _
    $region35: #{tpu_custom_call.1} parent=1 // pred_check_branch
      %72 = sbr.rel (0) target = $region37
    $region36: #{tpu_custom_call.1} parent=1 // pred_region
      %73 = dma.done [#allocation9], 18432
    $region37: #{tpu_custom_call.1} parent=1 // pred_fallthru
      _
    %v75 = vld [vmem:[#allocation2] sm:$0xff]
    %v76 = vld [vmem:[#allocation2 + $0x8] sm:$0xff]
    %v77 = vld [vmem:[#allocation2 + $0x10] sm:$0xff]
    %v78 = vld [vmem:[#allocation2 + $0x18] sm:$0xff]
    %v79 = vpack.c.bf16 %v77, %v75
    %v80 = vpack.c.bf16 %v78, %v76
    %v81 = vld [vmem:[#allocation5] sm:$0xff]
    %v82 = vld [vmem:[#allocation5 + $0x8] sm:$0xff]
    %v83 = vld [vmem:[#allocation5 + $0x10] sm:$0xff]
    %v84 = vld [vmem:[#allocation5 + $0x18] sm:$0xff]
    %v85 = vld [vmem:[#allocation5 + $0x20] sm:$0xf]
    %v86 = vld [vmem:[#allocation5 + $0x24] sm:$0xff]
    %v87 = vld [vmem:[#allocation5 + $0x2c] sm:$0xff]
    %v88 = vld [vmem:[#allocation5 + $0x34] sm:$0xff]
    %v89 = vld [vmem:[#allocation5 + $0x3c] sm:$0xff]
    %v90 = vld [vmem:[#allocation5 + $0x44] sm:$0xf]
    %v91 = vld [vmem:[#allocation5 + $0x48] sm:$0xff]
    %v92 = vld [vmem:[#allocation5 + $0x50] sm:$0xff]
    %v93 = vld [vmem:[#allocation5 + $0x58] sm:$0xff]
    %v94 = vld [vmem:[#allocation5 + $0x60] sm:$0xff]
    %v95 = vld [vmem:[#allocation5 + $0x68] sm:$0xf]
    %v96 = vld [vmem:[#allocation5 + $0x6c] sm:$0xff]
    %v97 = vld [vmem:[#allocation5 + $0x74] sm:$0xff]
    %v98 = vld [vmem:[#allocation5 + $0x7c] sm:$0xff]
    %v99 = vld [vmem:[#allocation5 + $0x84] sm:$0xff]
    %v100 = vld [vmem:[#allocation5 + $0x8c] sm:$0xf]
    %v101 = vld [vmem:[#allocation5 + $0x90] sm:$0xff]
    %v102 = vld [vmem:[#allocation5 + $0x98] sm:$0xff]
    %v103 = vld [vmem:[#allocation5 + $0xa0] sm:$0xff]
    %v104 = vld [vmem:[#allocation5 + $0xa8] sm:$0xff]
    %v105 = vld [vmem:[#allocation5 + $0xb0] sm:$0xf]
    %v106 = vld [vmem:[#allocation5 + $0xb4] sm:$0xff]
    %v107 = vld [vmem:[#allocation5 + $0xbc] sm:$0xff]
    %v108 = vld [vmem:[#allocation5 + $0xc4] sm:$0xff]
    %v109 = vld [vmem:[#allocation5 + $0xcc] sm:$0xff]
    %v110 = vld [vmem:[#allocation5 + $0xd4] sm:$0xf]
    %v111 = vld [vmem:[#allocation5 + $0xd8] sm:$0xff]
    %v112 = vld [vmem:[#allocation5 + $0xe0] sm:$0xff]
    %v113 = vld [vmem:[#allocation5 + $0xe8] sm:$0xff]
    %v114 = vld [vmem:[#allocation5 + $0xf0] sm:$0xff]
    %v115 = vld [vmem:[#allocation5 + $0xf8] sm:$0xf]
    %v116 = vld [vmem:[#allocation5 + $0xfc] sm:$0xff]
    %v117 = vld [vmem:[#allocation5 + $0x104] sm:$0xff]
    %v118 = vld [vmem:[#allocation5 + $0x10c] sm:$0xff]
    %v119 = vld [vmem:[#allocation5 + $0x114] sm:$0xff]
    %v120 = vld [vmem:[#allocation5 + $0x11c] sm:$0xf]
    %v121 = vld [vmem:[#allocation5 + $0x120] sm:$0xff]
    %v122 = vld [vmem:[#allocation5 + $0x128] sm:$0xff]
    %v123 = vld [vmem:[#allocation5 + $0x130] sm:$0xff]
    %v124 = vld [vmem:[#allocation5 + $0x138] sm:$0xff]
    %v125 = vld [vmem:[#allocation5 + $0x140] sm:$0xf]
    %v126 = vld [vmem:[#allocation5 + $0x144] sm:$0xff]
    %v127 = vld [vmem:[#allocation5 + $0x14c] sm:$0xff]
    %v128 = vld [vmem:[#allocation5 + $0x154] sm:$0xff]
    %v129 = vld [vmem:[#allocation5 + $0x15c] sm:$0xff]
    %v130 = vld [vmem:[#allocation5 + $0x164] sm:$0xf]
    %v131 = vld [vmem:[#allocation5 + $0x168] sm:$0xff]
    %v132 = vld [vmem:[#allocation5 + $0x170] sm:$0xff]
    %v133 = vld [vmem:[#allocation5 + $0x178] sm:$0xff]
    %v134 = vld [vmem:[#allocation5 + $0x180] sm:$0xff]
    %v135 = vld [vmem:[#allocation5 + $0x188] sm:$0xf]
    %v136 = vld [vmem:[#allocation5 + $0x18c] sm:$0xff]
    %v137 = vld [vmem:[#allocation5 + $0x194] sm:$0xff]
    %v138 = vld [vmem:[#allocation5 + $0x19c] sm:$0xff]
    %v139 = vld [vmem:[#allocation5 + $0x1a4] sm:$0xff]
    %v140 = vld [vmem:[#allocation5 + $0x1ac] sm:$0xf]
    %v141 = vld [vmem:[#allocation5 + $0x1b0] sm:$0xff]
    %v142 = vld [vmem:[#allocation5 + $0x1b8] sm:$0xff]
    %v143 = vld [vmem:[#allocation5 + $0x1c0] sm:$0xff]
    %v144 = vld [vmem:[#allocation5 + $0x1c8] sm:$0xff]
    %v145 = vld [vmem:[#allocation5 + $0x1d0] sm:$0xf]
    %v146 = vld [vmem:[#allocation5 + $0x1d4] sm:$0xff]
    %v147 = vld [vmem:[#allocation5 + $0x1dc] sm:$0xff]
    %v148 = vld [vmem:[#allocation5 + $0x1e4] sm:$0xff]
    %v149 = vld [vmem:[#allocation5 + $0x1ec] sm:$0xff]
    %v150 = vld [vmem:[#allocation5 + $0x1f4] sm:$0xf]
    %v151 = vld [vmem:[#allocation5 + $0x1f8] sm:$0xff]
    %v152 = vld [vmem:[#allocation5 + $0x200] sm:$0xff]
    %v153 = vld [vmem:[#allocation5 + $0x208] sm:$0xff]
    %v154 = vld [vmem:[#allocation5 + $0x210] sm:$0xff]
    %v155 = vld [vmem:[#allocation5 + $0x218] sm:$0xf]
    %v156 = vld [vmem:[#allocation5 + $0x21c] sm:$0xff]
    %v157 = vld [vmem:[#allocation5 + $0x224] sm:$0xff]
    %v158 = vld [vmem:[#allocation5 + $0x22c] sm:$0xff]
    %v159 = vld [vmem:[#allocation5 + $0x234] sm:$0xff]
    %v160 = vld [vmem:[#allocation5 + $0x23c] sm:$0xf]
    %v161 = vld [vmem:[#allocation5 + $0x240] sm:$0xff]
    %v162 = vld [vmem:[#allocation5 + $0x248] sm:$0xff]
    %v163 = vld [vmem:[#allocation5 + $0x250] sm:$0xff]
    %v164 = vld [vmem:[#allocation5 + $0x258] sm:$0xff]
    %v165 = vld [vmem:[#allocation5 + $0x260] sm:$0xf]
    %v166 = vld [vmem:[#allocation5 + $0x264] sm:$0xff]
    %v167 = vld [vmem:[#allocation5 + $0x26c] sm:$0xff]
    %v168 = vld [vmem:[#allocation5 + $0x274] sm:$0xff]
    %v169 = vld [vmem:[#allocation5 + $0x27c] sm:$0xff]
    %v170 = vld [vmem:[#allocation5 + $0x284] sm:$0xf]
    %v171 = vld [vmem:[#allocation5 + $0x288] sm:$0xff]
    %v172 = vld [vmem:[#allocation5 + $0x290] sm:$0xff]
    %v173 = vld [vmem:[#allocation5 + $0x298] sm:$0xff]
    %v174 = vld [vmem:[#allocation5 + $0x2a0] sm:$0xff]
    %v175 = vld [vmem:[#allocation5 + $0x2a8] sm:$0xf]
    %v176 = vld [vmem:[#allocation5 + $0x2ac] sm:$0xff]
    %v177 = vld [vmem:[#allocation5 + $0x2b4] sm:$0xff]
    %v178 = vld [vmem:[#allocation5 + $0x2bc] sm:$0xff]
    %v179 = vld [vmem:[#allocation5 + $0x2c4] sm:$0xff]
    %v180 = vld [vmem:[#allocation5 + $0x2cc] sm:$0xf]
    %v181 = vld [vmem:[#allocation5 + $0x2d0] sm:$0xff]
    %v182 = vld [vmem:[#allocation5 + $0x2d8] sm:$0xff]
    %v183 = vld [vmem:[#allocation5 + $0x2e0] sm:$0xff]
    %v184 = vld [vmem:[#allocation5 + $0x2e8] sm:$0xff]
    %v185 = vld [vmem:[#allocation5 + $0x2f0] sm:$0xf]
    %v186 = vld [vmem:[#allocation5 + $0x2f4] sm:$0xff]
    %v187 = vld [vmem:[#allocation5 + $0x2fc] sm:$0xff]
    %v188 = vld [vmem:[#allocation5 + $0x304] sm:$0xff]
    %v189 = vld [vmem:[#allocation5 + $0x30c] sm:$0xff]
    %v190 = vld [vmem:[#allocation5 + $0x314] sm:$0xf]
    %v191 = vld [vmem:[#allocation5 + $0x318] sm:$0xff]
    %v192 = vld [vmem:[#allocation5 + $0x320] sm:$0xff]
    %v193 = vld [vmem:[#allocation5 + $0x328] sm:$0xff]
    %v194 = vld [vmem:[#allocation5 + $0x330] sm:$0xff]
    %v195 = vld [vmem:[#allocation5 + $0x338] sm:$0xf]
    %v196 = vld [vmem:[#allocation5 + $0x33c] sm:$0xff]
    %v197 = vld [vmem:[#allocation5 + $0x344] sm:$0xff]
    %v198 = vld [vmem:[#allocation5 + $0x34c] sm:$0xff]
    %v199 = vld [vmem:[#allocation5 + $0x354] sm:$0xff]
    %v200 = vld [vmem:[#allocation5 + $0x35c] sm:$0xf]
    %v201 = vld [vmem:[#allocation7] sm:$0xff]
    %v202 = vld [vmem:[#allocation7 + $0x8] sm:$0x1]
    %v205 = vlaneseq
    %v206 = vshrl.u32 %v205, 7
    %v207 = vsub.s32 0, %v206
    %v208 = vrot.slane %v201, %v207
    %v209 = vlaneseq
    %v210 = vshrl.u32 %v209, 7
    %v211 = vsub.s32 1, %v210
    %v212 = vrot.slane %v201, %v211
    %v213 = vlaneseq
    %v214 = vshrl.u32 %v213, 7
    %v215 = vsub.s32 2, %v214
    %v216 = vrot.slane %v201, %v215
    %v217 = vlaneseq
    %v218 = vshrl.u32 %v217, 7
    %v219 = vsub.s32 3, %v218
    %v220 = vrot.slane %v201, %v219
    %v221 = vlaneseq
    %v222 = vshrl.u32 %v221, 7
    %v223 = vsub.s32 4, %v222
    %v224 = vrot.slane %v201, %v223
    %v225 = vlaneseq
    %v226 = vshrl.u32 %v225, 7
    %v227 = vsub.s32 5, %v226
    %v228 = vrot.slane %v201, %v227
    %v229 = vlaneseq
    %v230 = vshrl.u32 %v229, 7
    %v231 = vsub.s32 6, %v230
    %v232 = vrot.slane %v201, %v231
    %v233 = vlaneseq
    %v234 = vshrl.u32 %v233, 7
    %v235 = vsub.s32 7, %v234
    %v236 = vrot.slane %v201, %v235
    %v237 = vlaneseq
    %v238 = vshrl.u32 %v237, 7
    %v239 = vsub.s32 0, %v238
    %v240 = vrot.slane %v202, %v239
    %v370 = vunpack.c.l.b16 %v81
    %v371 = vunpack.c.h.b16 %v81
    %v372 = vunpack.c.l.b16 %v82
    %v373 = vunpack.c.h.b16 %v82
    %v374 = vunpack.c.l.b16 %v83
    %v375 = vunpack.c.h.b16 %v83
    %v376 = vunpack.c.l.b16 %v84
    %v377 = vunpack.c.h.b16 %v84
    %v378 = vunpack.c.l.b16 %v85
    %v379 = vunpack.c.l.b16 %v86
    %v380 = vunpack.c.h.b16 %v86
    %v381 = vunpack.c.l.b16 %v87
    %v382 = vunpack.c.h.b16 %v87
    %v383 = vunpack.c.l.b16 %v88
    %v384 = vunpack.c.h.b16 %v88
    %v385 = vunpack.c.l.b16 %v89
    %v386 = vunpack.c.h.b16 %v89
    %v387 = vunpack.c.l.b16 %v90
    %v388 = vunpack.c.l.b16 %v91
    %v389 = vunpack.c.h.b16 %v91
    %v390 = vunpack.c.l.b16 %v92
    %v391 = vunpack.c.h.b16 %v92
    %v392 = vunpack.c.l.b16 %v93
    %v393 = vunpack.c.h.b16 %v93
    %v394 = vunpack.c.l.b16 %v94
    %v395 = vunpack.c.h.b16 %v94
    %v396 = vunpack.c.l.b16 %v95
    %v397 = vunpack.c.l.b16 %v96
    %v398 = vunpack.c.h.b16 %v96
    %v399 = vunpack.c.l.b16 %v97
    %v400 = vunpack.c.h.b16 %v97
    %v401 = vunpack.c.l.b16 %v98
    %v402 = vunpack.c.h.b16 %v98
    %v403 = vunpack.c.l.b16 %v99
    %v404 = vunpack.c.h.b16 %v99
    %v405 = vunpack.c.l.b16 %v100
    %v406 = vunpack.c.l.b16 %v101
    %v407 = vunpack.c.h.b16 %v101
    %v408 = vunpack.c.l.b16 %v102
    %v409 = vunpack.c.h.b16 %v102
    %v410 = vunpack.c.l.b16 %v103
    %v411 = vunpack.c.h.b16 %v103
    %v412 = vunpack.c.l.b16 %v104
    %v413 = vunpack.c.h.b16 %v104
    %v414 = vunpack.c.l.b16 %v105
    %v415 = vunpack.c.l.b16 %v106
    %v416 = vunpack.c.h.b16 %v106
    %v417 = vunpack.c.l.b16 %v107
    %v418 = vunpack.c.h.b16 %v107
    %v419 = vunpack.c.l.b16 %v108
    %v420 = vunpack.c.h.b16 %v108
    %v421 = vunpack.c.l.b16 %v109
    %v422 = vunpack.c.h.b16 %v109
    %v423 = vunpack.c.l.b16 %v110
    %v424 = vunpack.c.l.b16 %v111
    %v425 = vunpack.c.h.b16 %v111
    %v426 = vunpack.c.l.b16 %v112
    %v427 = vunpack.c.h.b16 %v112
    %v428 = vunpack.c.l.b16 %v113
    %v429 = vunpack.c.h.b16 %v113
    %v430 = vunpack.c.l.b16 %v114
    %v431 = vunpack.c.h.b16 %v114
    %v432 = vunpack.c.l.b16 %v115
    %v433 = vunpack.c.l.b16 %v116
    %v434 = vunpack.c.h.b16 %v116
    %v435 = vunpack.c.l.b16 %v117
    %v436 = vunpack.c.h.b16 %v117
    %v437 = vunpack.c.l.b16 %v118
    %v438 = vunpack.c.h.b16 %v118
    %v439 = vunpack.c.l.b16 %v119
    %v440 = vunpack.c.h.b16 %v119
    %v441 = vunpack.c.l.b16 %v120
    %v442 = vunpack.c.l.b16 %v121
    %v443 = vunpack.c.h.b16 %v121
    %v444 = vunpack.c.l.b16 %v122
    %v445 = vunpack.c.h.b16 %v122
    %v446 = vunpack.c.l.b16 %v123
    %v447 = vunpack.c.h.b16 %v123
    %v448 = vunpack.c.l.b16 %v124
    %v449 = vunpack.c.h.b16 %v124
    %v450 = vunpack.c.l.b16 %v125
    %v451 = vunpack.c.l.b16 %v126
    %v452 = vunpack.c.h.b16 %v126
    %v453 = vunpack.c.l.b16 %v127
    %v454 = vunpack.c.h.b16 %v127
    %v455 = vunpack.c.l.b16 %v128
    %v456 = vunpack.c.h.b16 %v128
    %v457 = vunpack.c.l.b16 %v129
    %v458 = vunpack.c.h.b16 %v129
    %v459 = vunpack.c.l.b16 %v130
    %v460 = vunpack.c.l.b16 %v131
    %v461 = vunpack.c.h.b16 %v131
    %v462 = vunpack.c.l.b16 %v132
    %v463 = vunpack.c.h.b16 %v132
    %v464 = vunpack.c.l.b16 %v133
    %v465 = vunpack.c.h.b16 %v133
    %v466 = vunpack.c.l.b16 %v134
    %v467 = vunpack.c.h.b16 %v134
    %v468 = vunpack.c.l.b16 %v135
    %v469 = vunpack.c.l.b16 %v136
    %v470 = vunpack.c.h.b16 %v136
    %v471 = vunpack.c.l.b16 %v137
    %v472 = vunpack.c.h.b16 %v137
    %v473 = vunpack.c.l.b16 %v138
    %v474 = vunpack.c.h.b16 %v138
    %v475 = vunpack.c.l.b16 %v139
    %v476 = vunpack.c.h.b16 %v139
    %v477 = vunpack.c.l.b16 %v140
    %v478 = vunpack.c.l.b16 %v141
    %v479 = vunpack.c.h.b16 %v141
    %v480 = vunpack.c.l.b16 %v142
    %v481 = vunpack.c.h.b16 %v142
    %v482 = vunpack.c.l.b16 %v143
    %v483 = vunpack.c.h.b16 %v143
    %v484 = vunpack.c.l.b16 %v144
    %v485 = vunpack.c.h.b16 %v144
    %v486 = vunpack.c.l.b16 %v145
    %v487 = vunpack.c.l.b16 %v146
    %v488 = vunpack.c.h.b16 %v146
    %v489 = vunpack.c.l.b16 %v147
    %v490 = vunpack.c.h.b16 %v147
    %v491 = vunpack.c.l.b16 %v148
    %v492 = vunpack.c.h.b16 %v148
    %v493 = vunpack.c.l.b16 %v149
    %v494 = vunpack.c.h.b16 %v149
    %v495 = vunpack.c.l.b16 %v150
    %v496 = vunpack.c.l.b16 %v151
    %v497 = vunpack.c.h.b16 %v151
    %v498 = vunpack.c.l.b16 %v152
    %v499 = vunpack.c.h.b16 %v152
    %v500 = vunpack.c.l.b16 %v153
    %v501 = vunpack.c.h.b16 %v153
    %v502 = vunpack.c.l.b16 %v154
    %v503 = vunpack.c.h.b16 %v154
    %v504 = vunpack.c.l.b16 %v155
    %v505 = vunpack.c.l.b16 %v156
    %v506 = vunpack.c.h.b16 %v156
    %v507 = vunpack.c.l.b16 %v157
    %v508 = vunpack.c.h.b16 %v157
    %v509 = vunpack.c.l.b16 %v158
    %v510 = vunpack.c.h.b16 %v158
    %v511 = vunpack.c.l.b16 %v159
    %v512 = vunpack.c.h.b16 %v159
    %v513 = vunpack.c.l.b16 %v160
    %v514 = vunpack.c.l.b16 %v161
    %v515 = vunpack.c.h.b16 %v161
    %v516 = vunpack.c.l.b16 %v162
    %v517 = vunpack.c.h.b16 %v162
    %v518 = vunpack.c.l.b16 %v163
    %v519 = vunpack.c.h.b16 %v163
    %v520 = vunpack.c.l.b16 %v164
    %v521 = vunpack.c.h.b16 %v164
    %v522 = vunpack.c.l.b16 %v165
    %v523 = vunpack.c.l.b16 %v166
    %v524 = vunpack.c.h.b16 %v166
    %v525 = vunpack.c.l.b16 %v167
    %v526 = vunpack.c.h.b16 %v167
    %v527 = vunpack.c.l.b16 %v168
    %v528 = vunpack.c.h.b16 %v168
    %v529 = vunpack.c.l.b16 %v169
    %v530 = vunpack.c.h.b16 %v169
    %v531 = vunpack.c.l.b16 %v170
    %v532 = vunpack.c.l.b16 %v171
    %v533 = vunpack.c.h.b16 %v171
    %v534 = vunpack.c.l.b16 %v172
    %v535 = vunpack.c.h.b16 %v172
    %v536 = vunpack.c.l.b16 %v173
    %v537 = vunpack.c.h.b16 %v173
    %v538 = vunpack.c.l.b16 %v174
    %v539 = vunpack.c.h.b16 %v174
    %v540 = vunpack.c.l.b16 %v175
    %v541 = vunpack.c.l.b16 %v176
    %v542 = vunpack.c.h.b16 %v176
    %v543 = vunpack.c.l.b16 %v177
    %v544 = vunpack.c.h.b16 %v177
    %v545 = vunpack.c.l.b16 %v178
    %v546 = vunpack.c.h.b16 %v178
    %v547 = vunpack.c.l.b16 %v179
    %v548 = vunpack.c.h.b16 %v179
    %v549 = vunpack.c.l.b16 %v180
    %v550 = vunpack.c.l.b16 %v181
    %v551 = vunpack.c.h.b16 %v181
    %v552 = vunpack.c.l.b16 %v182
    %v553 = vunpack.c.h.b16 %v182
    %v554 = vunpack.c.l.b16 %v183
    %v555 = vunpack.c.h.b16 %v183
    %v556 = vunpack.c.l.b16 %v184
    %v557 = vunpack.c.h.b16 %v184
    %v558 = vunpack.c.l.b16 %v185
    %v559 = vunpack.c.l.b16 %v186
    %v560 = vunpack.c.h.b16 %v186
    %v561 = vunpack.c.l.b16 %v187
    %v562 = vunpack.c.h.b16 %v187
    %v563 = vunpack.c.l.b16 %v188
    %v564 = vunpack.c.h.b16 %v188
    %v565 = vunpack.c.l.b16 %v189
    %v566 = vunpack.c.h.b16 %v189
    %v567 = vunpack.c.l.b16 %v190
    %v568 = vunpack.c.l.b16 %v191
    %v569 = vunpack.c.h.b16 %v191
    %v570 = vunpack.c.l.b16 %v192
    %v571 = vunpack.c.h.b16 %v192
    %v572 = vunpack.c.l.b16 %v193
    %v573 = vunpack.c.h.b16 %v193
    %v574 = vunpack.c.l.b16 %v194
    %v575 = vunpack.c.h.b16 %v194
    %v576 = vunpack.c.l.b16 %v195
    %v577 = vunpack.c.l.b16 %v196
    %v578 = vunpack.c.h.b16 %v196
    %v579 = vunpack.c.l.b16 %v197
    %v580 = vunpack.c.h.b16 %v197
    %v581 = vunpack.c.l.b16 %v198
    %v582 = vunpack.c.h.b16 %v198
    %v583 = vunpack.c.l.b16 %v199
    %v584 = vunpack.c.h.b16 %v199
    %v585 = vunpack.c.l.b16 %v200
    %v586 = vpack.c.b16 %v379, %v370
    %v587 = vpack.c.b16 %v380, %v371
    %v588 = vpack.c.b16 %v381, %v372
    %v589 = vpack.c.b16 %v382, %v373
    %v590 = vpack.c.b16 %v383, %v374
    %v591 = vpack.c.b16 %v384, %v375
    %v592 = vpack.c.b16 %v385, %v376
    %v593 = vpack.c.b16 %v386, %v377
    %v594 = vpack.c.b16 %v387, %v378
    %v595 = vpack.c.b16 %v397, %v388
    %v596 = vpack.c.b16 %v398, %v389
    %v597 = vpack.c.b16 %v399, %v390
    %v598 = vpack.c.b16 %v400, %v391
    %v599 = vpack.c.b16 %v401, %v392
    %v600 = vpack.c.b16 %v402, %v393
    %v601 = vpack.c.b16 %v403, %v394
    %v602 = vpack.c.b16 %v404, %v395
    %v603 = vpack.c.b16 %v405, %v396
    %v604 = vpack.c.b16 %v415, %v406
    %v605 = vpack.c.b16 %v416, %v407
    %v606 = vpack.c.b16 %v417, %v408
    %v607 = vpack.c.b16 %v418, %v409
    %v608 = vpack.c.b16 %v419, %v410
    %v609 = vpack.c.b16 %v420, %v411
    %v610 = vpack.c.b16 %v421, %v412
    %v611 = vpack.c.b16 %v422, %v413
    %v612 = vpack.c.b16 %v423, %v414
    %v613 = vpack.c.b16 %v433, %v424
    %v614 = vpack.c.b16 %v434, %v425
    %v615 = vpack.c.b16 %v435, %v426
    %v616 = vpack.c.b16 %v436, %v427
    %v617 = vpack.c.b16 %v437, %v428
    %v618 = vpack.c.b16 %v438, %v429
    %v619 = vpack.c.b16 %v439, %v430
    %v620 = vpack.c.b16 %v440, %v431
    %v621 = vpack.c.b16 %v441, %v432
    %v622 = vpack.c.b16 %v451, %v442
    %v623 = vpack.c.b16 %v452, %v443
    %v624 = vpack.c.b16 %v453, %v444
    %v625 = vpack.c.b16 %v454, %v445
    %v626 = vpack.c.b16 %v455, %v446
    %v627 = vpack.c.b16 %v456, %v447
    %v628 = vpack.c.b16 %v457, %v448
    %v629 = vpack.c.b16 %v458, %v449
    %v630 = vpack.c.b16 %v459, %v450
    %v631 = vpack.c.b16 %v469, %v460
    %v632 = vpack.c.b16 %v470, %v461
    %v633 = vpack.c.b16 %v471, %v462
    %v634 = vpack.c.b16 %v472, %v463
    %v635 = vpack.c.b16 %v473, %v464
    %v636 = vpack.c.b16 %v474, %v465
    %v637 = vpack.c.b16 %v475, %v466
    %v638 = vpack.c.b16 %v476, %v467
    %v639 = vpack.c.b16 %v477, %v468
    %v640 = vpack.c.b16 %v487, %v478
    %v641 = vpack.c.b16 %v488, %v479
    %v642 = vpack.c.b16 %v489, %v480
    %v643 = vpack.c.b16 %v490, %v481
    %v644 = vpack.c.b16 %v491, %v482
    %v645 = vpack.c.b16 %v492, %v483
    %v646 = vpack.c.b16 %v493, %v484
    %v647 = vpack.c.b16 %v494, %v485
    %v648 = vpack.c.b16 %v495, %v486
    %v649 = vpack.c.b16 %v505, %v496
    %v650 = vpack.c.b16 %v506, %v497
    %v651 = vpack.c.b16 %v507, %v498
    %v652 = vpack.c.b16 %v508, %v499
    %v653 = vpack.c.b16 %v509, %v500
    %v654 = vpack.c.b16 %v510, %v501
    %v655 = vpack.c.b16 %v511, %v502
    %v656 = vpack.c.b16 %v512, %v503
    %v657 = vpack.c.b16 %v513, %v504
    %v658 = vpack.c.b16 %v523, %v514
    %v659 = vpack.c.b16 %v524, %v515
    %v660 = vpack.c.b16 %v525, %v516
    %v661 = vpack.c.b16 %v526, %v517
    %v662 = vpack.c.b16 %v527, %v518
    %v663 = vpack.c.b16 %v528, %v519
    %v664 = vpack.c.b16 %v529, %v520
    %v665 = vpack.c.b16 %v530, %v521
    %v666 = vpack.c.b16 %v531, %v522
    %v667 = vpack.c.b16 %v541, %v532
    %v668 = vpack.c.b16 %v542, %v533
    %v669 = vpack.c.b16 %v543, %v534
    %v670 = vpack.c.b16 %v544, %v535
    %v671 = vpack.c.b16 %v545, %v536
    %v672 = vpack.c.b16 %v546, %v537
    %v673 = vpack.c.b16 %v547, %v538
    %v674 = vpack.c.b16 %v548, %v539
    %v675 = vpack.c.b16 %v549, %v540
    %v676 = vpack.c.b16 %v559, %v550
    %v677 = vpack.c.b16 %v560, %v551
    %v678 = vpack.c.b16 %v561, %v552
    %v679 = vpack.c.b16 %v562, %v553
    %v680 = vpack.c.b16 %v563, %v554
    %v681 = vpack.c.b16 %v564, %v555
    %v682 = vpack.c.b16 %v565, %v556
    %v683 = vpack.c.b16 %v566, %v557
    %v684 = vpack.c.b16 %v567, %v558
    %v685 = vpack.c.b16 %v577, %v568
    %v686 = vpack.c.b16 %v578, %v569
    %v687 = vpack.c.b16 %v579, %v570
    %v688 = vpack.c.b16 %v580, %v571
    %v689 = vpack.c.b16 %v581, %v572
    %v690 = vpack.c.b16 %v582, %v573
    %v691 = vpack.c.b16 %v583, %v574
    %v692 = vpack.c.b16 %v584, %v575
    %v693 = vpack.c.b16 %v585, %v576
    %vm802 = vcmask 523264
    %v804 = vsel %vm802, %v80, 0
    %806 = vmatprep.subr.bf16.mxu0 %v587
    %807 = vmatpush1.bf16.msra.mxu0 %v586
    %808 = vmatprep.subr.bf16.mxu0 %v596
    %809 = vmatpush1.bf16.msra.mxu0 %v595
    %810 = vmatprep.subr.bf16.mxu0 %v605
    %811 = vmatpush1.bf16.msra.mxu0 %v604
    %812 = vmatprep.subr.bf16.mxu0 %v614
    %813 = vmatpush1.bf16.msra.mxu0 %v613
    %814 = vmatprep.subr.bf16.mxu0 %v623
    %815 = vmatpush1.bf16.msra.mxu0 %v622
    %816 = vmatprep.subr.bf16.mxu0 %v632
    %817 = vmatpush1.bf16.msra.mxu0 %v631
    %818 = vmatprep.subr.bf16.mxu0 %v641
    %819 = vmatpush1.bf16.msra.mxu0 %v640
    %820 = vmatprep.subr.bf16.mxu0 %v650
    %821 = vmatpush1.bf16.msra.mxu0 %v649
    %822 = vmatprep.subr.bf16.mxu0 %v659
    %823 = vmatpush1.bf16.msra.mxu0 %v658
    %824 = vmatprep.subr.bf16.mxu0 %v668
    %825 = vmatpush1.bf16.msra.mxu0 %v667
    %826 = vmatprep.subr.bf16.mxu0 %v677
    %827 = vmatpush1.bf16.msra.mxu0 %v676
    %828 = vmatprep.subr.bf16.mxu0 %v686
    %829 = vmatpush1.bf16.msra.mxu0 %v685
    %830 = vmatprep.subr.bf16.mxu0 0
    %831 = vmatpush1.bf16.msra.mxu0 0
    %832 = vmatprep.subr.bf16.mxu0 0
    %833 = vmatpush1.bf16.msra.mxu0 0
    %834 = vmatprep.subr.bf16.mxu0 0
    %835 = vmatpush1.bf16.msra.mxu0 0
    %836 = vmatprep.subr.bf16.mxu0 0
    %837 = vmatpush1.bf16.msra.mxu0 0
    %838 = vmatprep.mubr.bf16.mxu0 %v804
    %839 = vmatmul.mubr.bf16.gmra.mrb[0].mxu0 %v79
    %v840 = vpop.f32.mrb[0].mxu0
    %v841 = vadd.f32 %v208, %v840
    %v842 = vpop.f32.mrb[0].mxu0
    %v843 = vadd.f32 %v212, %v842
    %v844 = vpop.f32.mrb[0].mxu0
    %v845 = vadd.f32 %v208, %v844
    %v846 = vpop.f32.mrb[0].mxu0
    %v847 = vadd.f32 %v212, %v846
    %848 = vdwg.mxu0
    %849 = vmatprep.subr.bf16.mxu0 %v589
    %850 = vmatpush1.bf16.msra.mxu0 %v588
    %851 = vmatprep.subr.bf16.mxu0 %v598
    %852 = vmatpush1.bf16.msra.mxu0 %v597
    %853 = vmatprep.subr.bf16.mxu0 %v607
    %854 = vmatpush1.bf16.msra.mxu0 %v606
    %855 = vmatprep.subr.bf16.mxu0 %v616
    %856 = vmatpush1.bf16.msra.mxu0 %v615
    %857 = vmatprep.subr.bf16.mxu0 %v625
    %858 = vmatpush1.bf16.msra.mxu0 %v624
    %859 = vmatprep.subr.bf16.mxu0 %v634
    %860 = vmatpush1.bf16.msra.mxu0 %v633
    %861 = vmatprep.subr.bf16.mxu0 %v643
    %862 = vmatpush1.bf16.msra.mxu0 %v642
    %863 = vmatprep.subr.bf16.mxu0 %v652
    %864 = vmatpush1.bf16.msra.mxu0 %v651
    %865 = vmatprep.subr.bf16.mxu0 %v661
    %866 = vmatpush1.bf16.msra.mxu0 %v660
    %867 = vmatprep.subr.bf16.mxu0 %v670
    %868 = vmatpush1.bf16.msra.mxu0 %v669
    %869 = vmatprep.subr.bf16.mxu0 %v679
    %870 = vmatpush1.bf16.msra.mxu0 %v678
    %871 = vmatprep.subr.bf16.mxu0 %v688
    %872 = vmatpush1.bf16.msra.mxu0 %v687
    %873 = vmatprep.subr.bf16.mxu0 0
    %874 = vmatpush1.bf16.msra.mxu0 0
    %875 = vmatprep.subr.bf16.mxu0 0
    %876 = vmatpush1.bf16.msra.mxu0 0
    %877 = vmatprep.subr.bf16.mxu0 0
    %878 = vmatpush1.bf16.msra.mxu0 0
    %879 = vmatprep.subr.bf16.mxu0 0
    %880 = vmatpush1.bf16.msra.mxu0 0
    %881 = vmatprep.mubr.bf16.mxu0 %v804
    %882 = vmatmul.mubr.bf16.gmra.mrb[0].mxu0 %v79
    %v883 = vpop.f32.mrb[0].mxu0
    %v884 = vadd.f32 %v216, %v883
    %v885 = vpop.f32.mrb[0].mxu0
    %v886 = vadd.f32 %v220, %v885
    %v887 = vpop.f32.mrb[0].mxu0
    %v888 = vadd.f32 %v216, %v887
    %v889 = vpop.f32.mrb[0].mxu0
    %v890 = vadd.f32 %v220, %v889
    %891 = vdwg.mxu0
    %892 = vmatprep.subr.bf16.mxu0 %v591
    %893 = vmatpush1.bf16.msra.mxu0 %v590
    %894 = vmatprep.subr.bf16.mxu0 %v600
    %895 = vmatpush1.bf16.msra.mxu0 %v599
    %896 = vmatprep.subr.bf16.mxu0 %v609
    %897 = vmatpush1.bf16.msra.mxu0 %v608
    %898 = vmatprep.subr.bf16.mxu0 %v618
    %899 = vmatpush1.bf16.msra.mxu0 %v617
    %900 = vmatprep.subr.bf16.mxu0 %v627
    %901 = vmatpush1.bf16.msra.mxu0 %v626
    %902 = vmatprep.subr.bf16.mxu0 %v636
    %903 = vmatpush1.bf16.msra.mxu0 %v635
    %904 = vmatprep.subr.bf16.mxu0 %v645
    %905 = vmatpush1.bf16.msra.mxu0 %v644
    %906 = vmatprep.subr.bf16.mxu0 %v654
    %907 = vmatpush1.bf16.msra.mxu0 %v653
    %908 = vmatprep.subr.bf16.mxu0 %v663
    %909 = vmatpush1.bf16.msra.mxu0 %v662
    %910 = vmatprep.subr.bf16.mxu0 %v672
    %911 = vmatpush1.bf16.msra.mxu0 %v671
    %912 = vmatprep.subr.bf16.mxu0 %v681
    %913 = vmatpush1.bf16.msra.mxu0 %v680
    %914 = vmatprep.subr.bf16.mxu0 %v690
    %915 = vmatpush1.bf16.msra.mxu0 %v689
    %916 = vmatprep.subr.bf16.mxu0 0
    %917 = vmatpush1.bf16.msra.mxu0 0
    %918 = vmatprep.subr.bf16.mxu0 0
    %919 = vmatpush1.bf16.msra.mxu0 0
    %920 = vmatprep.subr.bf16.mxu0 0
    %921 = vmatpush1.bf16.msra.mxu0 0
    %922 = vmatprep.subr.bf16.mxu0 0
    %923 = vmatpush1.bf16.msra.mxu0 0
    %924 = vmatprep.mubr.bf16.mxu0 %v804
    %925 = vmatmul.mubr.bf16.gmra.mrb[0].mxu0 %v79
    %v926 = vpop.f32.mrb[0].mxu0
    %v927 = vadd.f32 %v224, %v926
    %v928 = vpop.f32.mrb[0].mxu0
    %v929 = vadd.f32 %v228, %v928
    %v930 = vpop.f32.mrb[0].mxu0
    %v931 = vadd.f32 %v224, %v930
    %v932 = vpop.f32.mrb[0].mxu0
    %v933 = vadd.f32 %v228, %v932
    %934 = vdwg.mxu0
    %935 = vmatprep.subr.bf16.mxu0 %v593
    %936 = vmatpush1.bf16.msra.mxu0 %v592
    %937 = vmatprep.subr.bf16.mxu0 %v602
    %938 = vmatpush1.bf16.msra.mxu0 %v601
    %939 = vmatprep.subr.bf16.mxu0 %v611
    %940 = vmatpush1.bf16.msra.mxu0 %v610
    %941 = vmatprep.subr.bf16.mxu0 %v620
    %942 = vmatpush1.bf16.msra.mxu0 %v619
    %943 = vmatprep.subr.bf16.mxu0 %v629
    %944 = vmatpush1.bf16.msra.mxu0 %v628
    %945 = vmatprep.subr.bf16.mxu0 %v638
    %946 = vmatpush1.bf16.msra.mxu0 %v637
    %947 = vmatprep.subr.bf16.mxu0 %v647
    %948 = vmatpush1.bf16.msra.mxu0 %v646
    %949 = vmatprep.subr.bf16.mxu0 %v656
    %950 = vmatpush1.bf16.msra.mxu0 %v655
    %951 = vmatprep.subr.bf16.mxu0 %v665
    %952 = vmatpush1.bf16.msra.mxu0 %v664
    %953 = vmatprep.subr.bf16.mxu0 %v674
    %954 = vmatpush1.bf16.msra.mxu0 %v673
    %955 = vmatprep.subr.bf16.mxu0 %v683
    %956 = vmatpush1.bf16.msra.mxu0 %v682
    %957 = vmatprep.subr.bf16.mxu0 %v692
    %958 = vmatpush1.bf16.msra.mxu0 %v691
    %959 = vmatprep.subr.bf16.mxu0 0
    %960 = vmatpush1.bf16.msra.mxu0 0
    %961 = vmatprep.subr.bf16.mxu0 0
    %962 = vmatpush1.bf16.msra.mxu0 0
    %963 = vmatprep.subr.bf16.mxu0 0
    %964 = vmatpush1.bf16.msra.mxu0 0
    %965 = vmatprep.subr.bf16.mxu0 0
    %966 = vmatpush1.bf16.msra.mxu0 0
    %967 = vmatprep.mubr.bf16.mxu0 %v804
    %968 = vmatmul.mubr.bf16.gmra.mrb[0].mxu0 %v79
    %v969 = vpop.f32.mrb[0].mxu0
    %v970 = vadd.f32 %v232, %v969
    %v971 = vpop.f32.mrb[0].mxu0
    %v972 = vadd.f32 %v236, %v971
    %v973 = vpop.f32.mrb[0].mxu0
    %v974 = vadd.f32 %v232, %v973
    %v975 = vpop.f32.mrb[0].mxu0
    %v976 = vadd.f32 %v236, %v975
    %977 = vdwg.mxu0
    %978 = vmatprep.subr.bf16.mxu0 0
    %979 = vmatpush1.bf16.msra.mxu0 %v594
    %980 = vmatprep.subr.bf16.mxu0 0
    %981 = vmatpush1.bf16.msra.mxu0 %v603
    %982 = vmatprep.subr.bf16.mxu0 0
    %983 = vmatpush1.bf16.msra.mxu0 %v612
    %984 = vmatprep.subr.bf16.mxu0 0
    %985 = vmatpush1.bf16.msra.mxu0 %v621
    %986 = vmatprep.subr.bf16.mxu0 0
    %987 = vmatpush1.bf16.msra.mxu0 %v630
    %988 = vmatprep.subr.bf16.mxu0 0
    %989 = vmatpush1.bf16.msra.mxu0 %v639
    %990 = vmatprep.subr.bf16.mxu0 0
    %991 = vmatpush1.bf16.msra.mxu0 %v648
    %992 = vmatprep.subr.bf16.mxu0 0
    %993 = vmatpush1.bf16.msra.mxu0 %v657
    %994 = vmatprep.subr.bf16.mxu0 0
    %995 = vmatpush1.bf16.msra.mxu0 %v666
    %996 = vmatprep.subr.bf16.mxu0 0
    %997 = vmatpush1.bf16.msra.mxu0 %v675
    %998 = vmatprep.subr.bf16.mxu0 0
    %999 = vmatpush1.bf16.msra.mxu0 %v684
    %1000 = vmatprep.subr.bf16.mxu0 0
    %1001 = vmatpush1.bf16.msra.mxu0 %v693
    %1002 = vmatprep.subr.bf16.mxu0 0
    %1003 = vmatpush1.bf16.msra.mxu0 0
    %1004 = vmatprep.subr.bf16.mxu0 0
    %1005 = vmatpush1.bf16.msra.mxu0 0
    %1006 = vmatprep.subr.bf16.mxu0 0
    %1007 = vmatpush1.bf16.msra.mxu0 0
    %1008 = vmatprep.subr.bf16.mxu0 0
    %1009 = vmatpush1.bf16.msra.mxu0 0
    %1010 = vmatprep.mubr.bf16.mxu0 %v804
    %1011 = vmatmul.mubr.bf16.gmra.mrb[0].mxu0 %v79
    %v1012 = vpop.f32.mrb[0].mxu0
    %v1013 = vadd.f32 %v240, %v1012
    %v1014 = vpop.f32.mrb[0].mxu0
    %v1015 = vpop.f32.mrb[0].mxu0
    %v1016 = vadd.f32 %v240, %v1015
    %v1017 = vpop.f32.mrb[0].mxu0
    %1018 = vdwg.mxu0
    %v1019 = vmax.f32 %v841, 0.0
    %v1020 = vmax.f32 %v843, 0.0
    %v1021 = vmax.f32 %v884, 0.0
    %v1022 = vmax.f32 %v886, 0.0
    %v1023 = vmax.f32 %v927, 0.0
    %v1024 = vmax.f32 %v929, 0.0
    %v1025 = vmax.f32 %v970, 0.0
    %v1026 = vmax.f32 %v972, 0.0
    %v1027 = vmax.f32 %v1013, 0.0
    %v1028 = vmax.f32 %v845, 0.0
    %v1029 = vmax.f32 %v847, 0.0
    %v1030 = vmax.f32 %v888, 0.0
    %v1031 = vmax.f32 %v890, 0.0
    %v1032 = vmax.f32 %v931, 0.0
    %v1033 = vmax.f32 %v933, 0.0
    %v1034 = vmax.f32 %v974, 0.0
    %v1035 = vmax.f32 %v976, 0.0
    %v1036 = vmax.f32 %v1016, 0.0
    %v1037 = vpack.c.bf16 %v1028, %v1019
    %v1038 = vpack.c.bf16 %v1029, %v1020
    %v1039 = vpack.c.bf16 %v1030, %v1021
    %v1040 = vpack.c.bf16 %v1031, %v1022
    %v1041 = vpack.c.bf16 %v1032, %v1023
    %v1042 = vpack.c.bf16 %v1033, %v1024
    %v1043 = vpack.c.bf16 %v1034, %v1025
    %v1044 = vpack.c.bf16 %v1035, %v1026
    %v1045 = vpack.c.bf16 %v1036, %v1027
    %v1046 = vld [vmem:[#allocation8] sm:$0xff]
    %v1047 = vld [vmem:[#allocation8 + $0x8] sm:$0xff]
    %v1048 = vld [vmem:[#allocation8 + $0x10] sm:$0xff]
    %v1049 = vld [vmem:[#allocation8 + $0x18] sm:$0xff]
    %v1050 = vld [vmem:[#allocation8 + $0x20] sm:$0xff]
    %v1051 = vld [vmem:[#allocation8 + $0x28] sm:$0xff]
    %v1052 = vld [vmem:[#allocation8 + $0x30] sm:$0xff]
    %v1053 = vld [vmem:[#allocation8 + $0x38] sm:$0xff]
    %v1054 = vld [vmem:[#allocation8 + $0x40] sm:$0xff]
    %v1055 = vld [vmem:[#allocation8 + $0x48] sm:$0xff]
    %v1056 = vld [vmem:[#allocation8 + $0x50] sm:$0xff]
    %v1057 = vld [vmem:[#allocation8 + $0x58] sm:$0xff]
    %v1058 = vld [vmem:[#allocation8 + $0x60] sm:$0xff]
    %v1059 = vld [vmem:[#allocation8 + $0x68] sm:$0xff]
    %v1060 = vld [vmem:[#allocation8 + $0x70] sm:$0xff]
    %v1061 = vld [vmem:[#allocation8 + $0x78] sm:$0xff]
    %v1062 = vld [vmem:[#allocation8 + $0x80] sm:$0xff]
    %v1063 = vld [vmem:[#allocation8 + $0x88] sm:$0xff]
    %v1064 = vld [vmem:[#allocation8 + $0x90] sm:$0xff]
    %v1065 = vld [vmem:[#allocation8 + $0x98] sm:$0xff]
    %v1066 = vld [vmem:[#allocation8 + $0xa0] sm:$0xff]
    %v1067 = vld [vmem:[#allocation8 + $0xa8] sm:$0xff]
    %v1068 = vld [vmem:[#allocation8 + $0xb0] sm:$0xff]
    %v1069 = vld [vmem:[#allocation8 + $0xb8] sm:$0xff]
    %v1070 = vld [vmem:[#allocation8 + $0xc0] sm:$0xff]
    %v1071 = vld [vmem:[#allocation8 + $0xc8] sm:$0xff]
    %v1072 = vld [vmem:[#allocation8 + $0xd0] sm:$0xff]
    %v1073 = vld [vmem:[#allocation8 + $0xd8] sm:$0xff]
    %v1074 = vld [vmem:[#allocation8 + $0xe0] sm:$0xff]
    %v1075 = vld [vmem:[#allocation8 + $0xe8] sm:$0xff]
    %v1076 = vld [vmem:[#allocation8 + $0xf0] sm:$0xff]
    %v1077 = vld [vmem:[#allocation8 + $0xf8] sm:$0xff]
    %v1078 = vld [vmem:[#allocation8 + $0x100] sm:$0xff]
    %v1079 = vld [vmem:[#allocation8 + $0x108] sm:$0xff]
    %v1080 = vld [vmem:[#allocation8 + $0x110] sm:$0xff]
    %v1081 = vld [vmem:[#allocation8 + $0x118] sm:$0xff]
    %v1082 = vld [vmem:[#allocation8 + $0x120] sm:$0xff]
    %v1083 = vld [vmem:[#allocation8 + $0x128] sm:$0xff]
    %v1084 = vld [vmem:[#allocation8 + $0x130] sm:$0xff]
    %v1085 = vld [vmem:[#allocation8 + $0x138] sm:$0xff]
    %v1086 = vld [vmem:[#allocation8 + $0x140] sm:$0xff]
    %v1087 = vld [vmem:[#allocation8 + $0x148] sm:$0xff]
    %v1088 = vld [vmem:[#allocation8 + $0x150] sm:$0xff]
    %v1089 = vld [vmem:[#allocation8 + $0x158] sm:$0xff]
    %v1090 = vld [vmem:[#allocation8 + $0x160] sm:$0xff]
    %v1091 = vld [vmem:[#allocation8 + $0x168] sm:$0xff]
    %v1092 = vld [vmem:[#allocation8 + $0x170] sm:$0xff]
    %v1093 = vld [vmem:[#allocation8 + $0x178] sm:$0xff]
    %v1094 = vld [vmem:[#allocation8 + $0x180] sm:$0xff]
    %v1095 = vld [vmem:[#allocation8 + $0x188] sm:$0xff]
    %v1096 = vld [vmem:[#allocation8 + $0x190] sm:$0xff]
    %v1097 = vld [vmem:[#allocation8 + $0x198] sm:$0xff]
    %v1098 = vld [vmem:[#allocation8 + $0x1a0] sm:$0xff]
    %v1099 = vld [vmem:[#allocation8 + $0x1a8] sm:$0xff]
    %v1100 = vld [vmem:[#allocation8 + $0x1b0] sm:$0xff]
    %v1101 = vld [vmem:[#allocation8 + $0x1b8] sm:$0xff]
    %v1102 = vld [vmem:[#allocation8 + $0x1c0] sm:$0xff]
    %v1103 = vld [vmem:[#allocation8 + $0x1c8] sm:$0xff]
    %v1104 = vld [vmem:[#allocation8 + $0x1d0] sm:$0xff]
    %v1105 = vld [vmem:[#allocation8 + $0x1d8] sm:$0xff]
    %v1106 = vld [vmem:[#allocation8 + $0x1e0] sm:$0xff]
    %v1107 = vld [vmem:[#allocation8 + $0x1e8] sm:$0xff]
    %v1108 = vld [vmem:[#allocation8 + $0x1f0] sm:$0xff]
    %v1109 = vld [vmem:[#allocation8 + $0x1f8] sm:$0xff]
    %v1110 = vld [vmem:[#allocation8 + $0x200] sm:$0xff]
    %v1111 = vld [vmem:[#allocation8 + $0x208] sm:$0xff]
    %v1112 = vld [vmem:[#allocation8 + $0x210] sm:$0xff]
    %v1113 = vld [vmem:[#allocation8 + $0x218] sm:$0xff]
    %v1114 = vld [vmem:[#allocation8 + $0x220] sm:$0xff]
    %v1115 = vld [vmem:[#allocation8 + $0x228] sm:$0xff]
    %v1116 = vld [vmem:[#allocation8 + $0x230] sm:$0xff]
    %v1117 = vld [vmem:[#allocation8 + $0x238] sm:$0xff]
    %v1118 = vld [vmem:[#allocation8 + $0x240] sm:$0xff]
    %v1119 = vld [vmem:[#allocation8 + $0x248] sm:$0xff]
    %v1120 = vld [vmem:[#allocation8 + $0x250] sm:$0xff]
    %v1121 = vld [vmem:[#allocation8 + $0x258] sm:$0xff]
    %v1122 = vld [vmem:[#allocation8 + $0x260] sm:$0xff]
    %v1123 = vld [vmem:[#allocation8 + $0x268] sm:$0xff]
    %v1124 = vld [vmem:[#allocation8 + $0x270] sm:$0xff]
    %v1125 = vld [vmem:[#allocation8 + $0x278] sm:$0xff]
    %v1126 = vld [vmem:[#allocation8 + $0x280] sm:$0xff]
    %v1127 = vld [vmem:[#allocation8 + $0x288] sm:$0xff]
    %v1128 = vld [vmem:[#allocation8 + $0x290] sm:$0xff]
    %v1129 = vld [vmem:[#allocation8 + $0x298] sm:$0xff]
    %v1130 = vld [vmem:[#allocation8 + $0x2a0] sm:$0xff]
    %v1131 = vld [vmem:[#allocation8 + $0x2a8] sm:$0xff]
    %v1132 = vld [vmem:[#allocation8 + $0x2b0] sm:$0xff]
    %v1133 = vld [vmem:[#allocation8 + $0x2b8] sm:$0xff]
    %v1134 = vld [vmem:[#allocation8 + $0x2c0] sm:$0xff]
    %v1135 = vld [vmem:[#allocation8 + $0x2c8] sm:$0xff]
    %v1136 = vld [vmem:[#allocation8 + $0x2d0] sm:$0xff]
    %v1137 = vld [vmem:[#allocation8 + $0x2d8] sm:$0xff]
    %v1138 = vld [vmem:[#allocation8 + $0x2e0] sm:$0xff]
    %v1139 = vld [vmem:[#allocation8 + $0x2e8] sm:$0xff]
    %v1140 = vld [vmem:[#allocation8 + $0x2f0] sm:$0xff]
    %v1141 = vld [vmem:[#allocation8 + $0x2f8] sm:$0xff]
    %v1142 = vld [vmem:[#allocation8 + $0x300] sm:$0xff]
    %v1143 = vld [vmem:[#allocation8 + $0x308] sm:$0xff]
    %v1144 = vld [vmem:[#allocation8 + $0x310] sm:$0xff]
    %v1145 = vld [vmem:[#allocation8 + $0x318] sm:$0xff]
    %v1146 = vld [vmem:[#allocation8 + $0x320] sm:$0xff]
    %v1147 = vld [vmem:[#allocation8 + $0x328] sm:$0xff]
    %v1148 = vld [vmem:[#allocation8 + $0x330] sm:$0xff]
    %v1149 = vld [vmem:[#allocation8 + $0x338] sm:$0xff]
    %v1150 = vld [vmem:[#allocation8 + $0x340] sm:$0xff]
    %v1151 = vld [vmem:[#allocation8 + $0x348] sm:$0xff]
    %v1152 = vld [vmem:[#allocation8 + $0x350] sm:$0xff]
    %v1153 = vld [vmem:[#allocation8 + $0x358] sm:$0xff]
    %v1154 = vld [vmem:[#allocation8 + $0x360] sm:$0xff]
    %v1155 = vld [vmem:[#allocation8 + $0x368] sm:$0xff]
    %v1156 = vld [vmem:[#allocation8 + $0x370] sm:$0xff]
    %v1157 = vld [vmem:[#allocation8 + $0x378] sm:$0xff]
    %v1158 = vld [vmem:[#allocation8 + $0x380] sm:$0xff]
    %v1159 = vld [vmem:[#allocation8 + $0x388] sm:$0xff]
    %v1160 = vld [vmem:[#allocation8 + $0x390] sm:$0xff]
    %v1161 = vld [vmem:[#allocation8 + $0x398] sm:$0xff]
    %v1162 = vld [vmem:[#allocation8 + $0x3a0] sm:$0xff]
    %v1163 = vld [vmem:[#allocation8 + $0x3a8] sm:$0xff]
    %v1164 = vld [vmem:[#allocation8 + $0x3b0] sm:$0xff]
    %v1165 = vld [vmem:[#allocation8 + $0x3b8] sm:$0xff]
    %v1166 = vld [vmem:[#allocation8 + $0x3c0] sm:$0xff]
    %v1167 = vld [vmem:[#allocation8 + $0x3c8] sm:$0xff]
    %v1168 = vld [vmem:[#allocation8 + $0x3d0] sm:$0xff]
    %v1169 = vld [vmem:[#allocation8 + $0x3d8] sm:$0xff]
    %v1170 = vld [vmem:[#allocation8 + $0x3e0] sm:$0xff]
    %v1171 = vld [vmem:[#allocation8 + $0x3e8] sm:$0xff]
    %v1172 = vld [vmem:[#allocation8 + $0x3f0] sm:$0xff]
    %v1173 = vld [vmem:[#allocation8 + $0x3f8] sm:$0xff]
    %v1174 = vld [vmem:[#allocation8 + $0x400] sm:$0xff]
    %v1175 = vld [vmem:[#allocation8 + $0x408] sm:$0xff]
    %v1176 = vld [vmem:[#allocation8 + $0x410] sm:$0xff]
    %v1177 = vld [vmem:[#allocation8 + $0x418] sm:$0xff]
    %v1178 = vld [vmem:[#allocation8 + $0x420] sm:$0xff]
    %v1179 = vld [vmem:[#allocation8 + $0x428] sm:$0xff]
    %v1180 = vld [vmem:[#allocation8 + $0x430] sm:$0xff]
    %v1181 = vld [vmem:[#allocation8 + $0x438] sm:$0xff]
    %v1182 = vld [vmem:[#allocation8 + $0x440] sm:$0xff]
    %v1183 = vld [vmem:[#allocation8 + $0x448] sm:$0xff]
    %v1184 = vld [vmem:[#allocation8 + $0x450] sm:$0xff]
    %v1185 = vld [vmem:[#allocation8 + $0x458] sm:$0xff]
    %v1186 = vld [vmem:[#allocation8 + $0x460] sm:$0xff]
    %v1187 = vld [vmem:[#allocation8 + $0x468] sm:$0xff]
    %v1188 = vld [vmem:[#allocation8 + $0x470] sm:$0xff]
    %v1189 = vld [vmem:[#allocation8 + $0x478] sm:$0xff]
    %v1190 = vld [vmem:[%s4] sm:$0x3]
    %v1192 = vlaneseq
    %v1193 = vshrl.u32 %v1192, 7
    %v1194 = vsub.s32 0, %v1193
    %v1195 = vrot.slane %v1190, %v1194
    %v1196 = vlaneseq
    %v1197 = vshrl.u32 %v1196, 7
    %v1198 = vsub.s32 1, %v1197
    %v1199 = vrot.slane %v1190, %v1198
    %v1346 = vunpack.c.l.b16 %v1046
    %v1347 = vunpack.c.h.b16 %v1046
    %v1348 = vunpack.c.l.b16 %v1047
    %v1349 = vunpack.c.h.b16 %v1047
    %v1350 = vunpack.c.l.b16 %v1048
    %v1351 = vunpack.c.h.b16 %v1048
    %v1352 = vunpack.c.l.b16 %v1049
    %v1353 = vunpack.c.h.b16 %v1049
    %v1354 = vunpack.c.l.b16 %v1050
    %v1355 = vunpack.c.h.b16 %v1050
    %v1356 = vunpack.c.l.b16 %v1051
    %v1357 = vunpack.c.h.b16 %v1051
    %v1358 = vunpack.c.l.b16 %v1052
    %v1359 = vunpack.c.h.b16 %v1052
    %v1360 = vunpack.c.l.b16 %v1053
    %v1361 = vunpack.c.h.b16 %v1053
    %v1362 = vunpack.c.l.b16 %v1054
    %v1363 = vunpack.c.h.b16 %v1054
    %v1364 = vunpack.c.l.b16 %v1055
    %v1365 = vunpack.c.h.b16 %v1055
    %v1366 = vunpack.c.l.b16 %v1056
    %v1367 = vunpack.c.h.b16 %v1056
    %v1368 = vunpack.c.l.b16 %v1057
    %v1369 = vunpack.c.h.b16 %v1057
    %v1370 = vunpack.c.l.b16 %v1058
    %v1371 = vunpack.c.h.b16 %v1058
    %v1372 = vunpack.c.l.b16 %v1059
    %v1373 = vunpack.c.h.b16 %v1059
    %v1374 = vunpack.c.l.b16 %v1060
    %v1375 = vunpack.c.h.b16 %v1060
    %v1376 = vunpack.c.l.b16 %v1061
    %v1377 = vunpack.c.h.b16 %v1061
    %v1378 = vunpack.c.l.b16 %v1062
    %v1379 = vunpack.c.h.b16 %v1062
    %v1380 = vunpack.c.l.b16 %v1063
    %v1381 = vunpack.c.h.b16 %v1063
    %v1382 = vunpack.c.l.b16 %v1064
    %v1383 = vunpack.c.h.b16 %v1064
    %v1384 = vunpack.c.l.b16 %v1065
    %v1385 = vunpack.c.h.b16 %v1065
    %v1386 = vunpack.c.l.b16 %v1066
    %v1387 = vunpack.c.h.b16 %v1066
    %v1388 = vunpack.c.l.b16 %v1067
    %v1389 = vunpack.c.h.b16 %v1067
    %v1390 = vunpack.c.l.b16 %v1068
    %v1391 = vunpack.c.h.b16 %v1068
    %v1392 = vunpack.c.l.b16 %v1069
    %v1393 = vunpack.c.h.b16 %v1069
    %v1394 = vunpack.c.l.b16 %v1070
    %v1395 = vunpack.c.h.b16 %v1070
    %v1396 = vunpack.c.l.b16 %v1071
    %v1397 = vunpack.c.h.b16 %v1071
    %v1398 = vunpack.c.l.b16 %v1072
    %v1399 = vunpack.c.h.b16 %v1072
    %v1400 = vunpack.c.l.b16 %v1073
    %v1401 = vunpack.c.h.b16 %v1073
    %v1402 = vunpack.c.l.b16 %v1074
    %v1403 = vunpack.c.h.b16 %v1074
    %v1404 = vunpack.c.l.b16 %v1075
    %v1405 = vunpack.c.h.b16 %v1075
    %v1406 = vunpack.c.l.b16 %v1076
    %v1407 = vunpack.c.h.b16 %v1076
    %v1408 = vunpack.c.l.b16 %v1077
    %v1409 = vunpack.c.h.b16 %v1077
    %v1410 = vunpack.c.l.b16 %v1078
    %v1411 = vunpack.c.h.b16 %v1078
    %v1412 = vunpack.c.l.b16 %v1079
    %v1413 = vunpack.c.h.b16 %v1079
    %v1414 = vunpack.c.l.b16 %v1080
    %v1415 = vunpack.c.h.b16 %v1080
    %v1416 = vunpack.c.l.b16 %v1081
    %v1417 = vunpack.c.h.b16 %v1081
    %v1418 = vunpack.c.l.b16 %v1082
    %v1419 = vunpack.c.h.b16 %v1082
    %v1420 = vunpack.c.l.b16 %v1083
    %v1421 = vunpack.c.h.b16 %v1083
    %v1422 = vunpack.c.l.b16 %v1084
    %v1423 = vunpack.c.h.b16 %v1084
    %v1424 = vunpack.c.l.b16 %v1085
    %v1425 = vunpack.c.h.b16 %v1085
    %v1426 = vunpack.c.l.b16 %v1086
    %v1427 = vunpack.c.h.b16 %v1086
    %v1428 = vunpack.c.l.b16 %v1087
    %v1429 = vunpack.c.h.b16 %v1087
    %v1430 = vunpack.c.l.b16 %v1088
    %v1431 = vunpack.c.h.b16 %v1088
    %v1432 = vunpack.c.l.b16 %v1089
    %v1433 = vunpack.c.h.b16 %v1089
    %v1434 = vunpack.c.l.b16 %v1090
    %v1435 = vunpack.c.h.b16 %v1090
    %v1436 = vunpack.c.l.b16 %v1091
    %v1437 = vunpack.c.h.b16 %v1091
    %v1438 = vunpack.c.l.b16 %v1092
    %v1439 = vunpack.c.h.b16 %v1092
    %v1440 = vunpack.c.l.b16 %v1093
    %v1441 = vunpack.c.h.b16 %v1093
    %v1442 = vunpack.c.l.b16 %v1094
    %v1443 = vunpack.c.h.b16 %v1094
    %v1444 = vunpack.c.l.b16 %v1095
    %v1445 = vunpack.c.h.b16 %v1095
    %v1446 = vunpack.c.l.b16 %v1096
    %v1447 = vunpack.c.h.b16 %v1096
    %v1448 = vunpack.c.l.b16 %v1097
    %v1449 = vunpack.c.h.b16 %v1097
    %v1450 = vunpack.c.l.b16 %v1098
    %v1451 = vunpack.c.h.b16 %v1098
    %v1452 = vunpack.c.l.b16 %v1099
    %v1453 = vunpack.c.h.b16 %v1099
    %v1454 = vunpack.c.l.b16 %v1100
    %v1455 = vunpack.c.h.b16 %v1100
    %v1456 = vunpack.c.l.b16 %v1101
    %v1457 = vunpack.c.h.b16 %v1101
    %v1458 = vunpack.c.l.b16 %v1102
    %v1459 = vunpack.c.h.b16 %v1102
    %v1460 = vunpack.c.l.b16 %v1103
    %v1461 = vunpack.c.h.b16 %v1103
    %v1462 = vunpack.c.l.b16 %v1104
    %v1463 = vunpack.c.h.b16 %v1104
    %v1464 = vunpack.c.l.b16 %v1105
    %v1465 = vunpack.c.h.b16 %v1105
    %v1466 = vunpack.c.l.b16 %v1106
    %v1467 = vunpack.c.h.b16 %v1106
    %v1468 = vunpack.c.l.b16 %v1107
    %v1469 = vunpack.c.h.b16 %v1107
    %v1470 = vunpack.c.l.b16 %v1108
    %v1471 = vunpack.c.h.b16 %v1108
    %v1472 = vunpack.c.l.b16 %v1109
    %v1473 = vunpack.c.h.b16 %v1109
    %v1474 = vunpack.c.l.b16 %v1110
    %v1475 = vunpack.c.h.b16 %v1110
    %v1476 = vunpack.c.l.b16 %v1111
    %v1477 = vunpack.c.h.b16 %v1111
    %v1478 = vunpack.c.l.b16 %v1112
    %v1479 = vunpack.c.h.b16 %v1112
    %v1480 = vunpack.c.l.b16 %v1113
    %v1481 = vunpack.c.h.b16 %v1113
    %v1482 = vunpack.c.l.b16 %v1114
    %v1483 = vunpack.c.h.b16 %v1114
    %v1484 = vunpack.c.l.b16 %v1115
    %v1485 = vunpack.c.h.b16 %v1115
    %v1486 = vunpack.c.l.b16 %v1116
    %v1487 = vunpack.c.h.b16 %v1116
    %v1488 = vunpack.c.l.b16 %v1117
    %v1489 = vunpack.c.h.b16 %v1117
    %v1490 = vunpack.c.l.b16 %v1118
    %v1491 = vunpack.c.h.b16 %v1118
    %v1492 = vunpack.c.l.b16 %v1119
    %v1493 = vunpack.c.h.b16 %v1119
    %v1494 = vunpack.c.l.b16 %v1120
    %v1495 = vunpack.c.h.b16 %v1120
    %v1496 = vunpack.c.l.b16 %v1121
    %v1497 = vunpack.c.h.b16 %v1121
    %v1498 = vunpack.c.l.b16 %v1122
    %v1499 = vunpack.c.h.b16 %v1122
    %v1500 = vunpack.c.l.b16 %v1123
    %v1501 = vunpack.c.h.b16 %v1123
    %v1502 = vunpack.c.l.b16 %v1124
    %v1503 = vunpack.c.h.b16 %v1124
    %v1504 = vunpack.c.l.b16 %v1125
    %v1505 = vunpack.c.h.b16 %v1125
    %v1506 = vunpack.c.l.b16 %v1126
    %v1507 = vunpack.c.h.b16 %v1126
    %v1508 = vunpack.c.l.b16 %v1127
    %v1509 = vunpack.c.h.b16 %v1127
    %v1510 = vunpack.c.l.b16 %v1128
    %v1511 = vunpack.c.h.b16 %v1128
    %v1512 = vunpack.c.l.b16 %v1129
    %v1513 = vunpack.c.h.b16 %v1129
    %v1514 = vunpack.c.l.b16 %v1130
    %v1515 = vunpack.c.h.b16 %v1130
    %v1516 = vunpack.c.l.b16 %v1131
    %v1517 = vunpack.c.h.b16 %v1131
    %v1518 = vunpack.c.l.b16 %v1132
    %v1519 = vunpack.c.h.b16 %v1132
    %v1520 = vunpack.c.l.b16 %v1133
    %v1521 = vunpack.c.h.b16 %v1133
    %v1522 = vunpack.c.l.b16 %v1134
    %v1523 = vunpack.c.h.b16 %v1134
    %v1524 = vunpack.c.l.b16 %v1135
    %v1525 = vunpack.c.h.b16 %v1135
    %v1526 = vunpack.c.l.b16 %v1136
    %v1527 = vunpack.c.h.b16 %v1136
    %v1528 = vunpack.c.l.b16 %v1137
    %v1529 = vunpack.c.h.b16 %v1137
    %v1530 = vunpack.c.l.b16 %v1138
    %v1531 = vunpack.c.h.b16 %v1138
    %v1532 = vunpack.c.l.b16 %v1139
    %v1533 = vunpack.c.h.b16 %v1139
    %v1534 = vunpack.c.l.b16 %v1140
    %v1535 = vunpack.c.h.b16 %v1140
    %v1536 = vunpack.c.l.b16 %v1141
    %v1537 = vunpack.c.h.b16 %v1141
    %v1538 = vunpack.c.l.b16 %v1142
    %v1539 = vunpack.c.h.b16 %v1142
    %v1540 = vunpack.c.l.b16 %v1143
    %v1541 = vunpack.c.h.b16 %v1143
    %v1542 = vunpack.c.l.b16 %v1144
    %v1543 = vunpack.c.h.b16 %v1144
    %v1544 = vunpack.c.l.b16 %v1145
    %v1545 = vunpack.c.h.b16 %v1145
    %v1546 = vunpack.c.l.b16 %v1146
    %v1547 = vunpack.c.h.b16 %v1146
    %v1548 = vunpack.c.l.b16 %v1147
    %v1549 = vunpack.c.h.b16 %v1147
    %v1550 = vunpack.c.l.b16 %v1148
    %v1551 = vunpack.c.h.b16 %v1148
    %v1552 = vunpack.c.l.b16 %v1149
    %v1553 = vunpack.c.h.b16 %v1149
    %v1554 = vunpack.c.l.b16 %v1150
    %v1555 = vunpack.c.h.b16 %v1150
    %v1556 = vunpack.c.l.b16 %v1151
    %v1557 = vunpack.c.h.b16 %v1151
    %v1558 = vunpack.c.l.b16 %v1152
    %v1559 = vunpack.c.h.b16 %v1152
    %v1560 = vunpack.c.l.b16 %v1153
    %v1561 = vunpack.c.h.b16 %v1153
    %v1562 = vunpack.c.l.b16 %v1154
    %v1563 = vunpack.c.h.b16 %v1154
    %v1564 = vunpack.c.l.b16 %v1155
    %v1565 = vunpack.c.h.b16 %v1155
    %v1566 = vunpack.c.l.b16 %v1156
    %v1567 = vunpack.c.h.b16 %v1156
    %v1568 = vunpack.c.l.b16 %v1157
    %v1569 = vunpack.c.h.b16 %v1157
    %v1570 = vunpack.c.l.b16 %v1158
    %v1571 = vunpack.c.h.b16 %v1158
    %v1572 = vunpack.c.l.b16 %v1159
    %v1573 = vunpack.c.h.b16 %v1159
    %v1574 = vunpack.c.l.b16 %v1160
    %v1575 = vunpack.c.h.b16 %v1160
    %v1576 = vunpack.c.l.b16 %v1161
    %v1577 = vunpack.c.h.b16 %v1161
    %v1578 = vunpack.c.l.b16 %v1162
    %v1579 = vunpack.c.h.b16 %v1162
    %v1580 = vunpack.c.l.b16 %v1163
    %v1581 = vunpack.c.h.b16 %v1163
    %v1582 = vunpack.c.l.b16 %v1164
    %v1583 = vunpack.c.h.b16 %v1164
    %v1584 = vunpack.c.l.b16 %v1165
    %v1585 = vunpack.c.h.b16 %v1165
    %v1586 = vunpack.c.l.b16 %v1166
    %v1587 = vunpack.c.h.b16 %v1166
    %v1588 = vunpack.c.l.b16 %v1167
    %v1589 = vunpack.c.h.b16 %v1167
    %v1590 = vunpack.c.l.b16 %v1168
    %v1591 = vunpack.c.h.b16 %v1168
    %v1592 = vunpack.c.l.b16 %v1169
    %v1593 = vunpack.c.h.b16 %v1169
    %v1594 = vunpack.c.l.b16 %v1170
    %v1595 = vunpack.c.h.b16 %v1170
    %v1596 = vunpack.c.l.b16 %v1171
    %v1597 = vunpack.c.h.b16 %v1171
    %v1598 = vunpack.c.l.b16 %v1172
    %v1599 = vunpack.c.h.b16 %v1172
    %v1600 = vunpack.c.l.b16 %v1173
    %v1601 = vunpack.c.h.b16 %v1173
    %v1602 = vunpack.c.l.b16 %v1174
    %v1603 = vunpack.c.h.b16 %v1174
    %v1604 = vunpack.c.l.b16 %v1175
    %v1605 = vunpack.c.h.b16 %v1175
    %v1606 = vunpack.c.l.b16 %v1176
    %v1607 = vunpack.c.h.b16 %v1176
    %v1608 = vunpack.c.l.b16 %v1177
    %v1609 = vunpack.c.h.b16 %v1177
    %v1610 = vunpack.c.l.b16 %v1178
    %v1611 = vunpack.c.h.b16 %v1178
    %v1612 = vunpack.c.l.b16 %v1179
    %v1613 = vunpack.c.h.b16 %v1179
    %v1614 = vunpack.c.l.b16 %v1180
    %v1615 = vunpack.c.h.b16 %v1180
    %v1616 = vunpack.c.l.b16 %v1181
    %v1617 = vunpack.c.h.b16 %v1181
    %v1618 = vunpack.c.l.b16 %v1182
    %v1619 = vunpack.c.h.b16 %v1182
    %v1620 = vunpack.c.l.b16 %v1183
    %v1621 = vunpack.c.h.b16 %v1183
    %v1622 = vunpack.c.l.b16 %v1184
    %v1623 = vunpack.c.h.b16 %v1184
    %v1624 = vunpack.c.l.b16 %v1185
    %v1625 = vunpack.c.h.b16 %v1185
    %v1626 = vunpack.c.l.b16 %v1186
    %v1627 = vunpack.c.h.b16 %v1186
    %v1628 = vunpack.c.l.b16 %v1187
    %v1629 = vunpack.c.h.b16 %v1187
    %v1630 = vunpack.c.l.b16 %v1188
    %v1631 = vunpack.c.h.b16 %v1188
    %v1632 = vunpack.c.l.b16 %v1189
    %v1633 = vunpack.c.h.b16 %v1189
    %v1634 = vpack.c.b16 %v1348, %v1346
    %v1635 = vpack.c.b16 %v1349, %v1347
    %v1636 = vpack.c.b16 %v1352, %v1350
    %v1637 = vpack.c.b16 %v1353, %v1351
    %v1638 = vpack.c.b16 %v1356, %v1354
    %v1639 = vpack.c.b16 %v1357, %v1355
    %v1640 = vpack.c.b16 %v1360, %v1358
    %v1641 = vpack.c.b16 %v1361, %v1359
    %v1642 = vpack.c.b16 %v1364, %v1362
    %v1643 = vpack.c.b16 %v1365, %v1363
    %v1644 = vpack.c.b16 %v1368, %v1366
    %v1645 = vpack.c.b16 %v1369, %v1367
    %v1646 = vpack.c.b16 %v1372, %v1370
    %v1647 = vpack.c.b16 %v1373, %v1371
    %v1648 = vpack.c.b16 %v1376, %v1374
    %v1649 = vpack.c.b16 %v1377, %v1375
    %v1650 = vpack.c.b16 %v1380, %v1378
    %v1651 = vpack.c.b16 %v1381, %v1379
    %v1652 = vpack.c.b16 %v1384, %v1382
    %v1653 = vpack.c.b16 %v1385, %v1383
    %v1654 = vpack.c.b16 %v1388, %v1386
    %v1655 = vpack.c.b16 %v1389, %v1387
    %v1656 = vpack.c.b16 %v1392, %v1390
    %v1657 = vpack.c.b16 %v1393, %v1391
    %v1658 = vpack.c.b16 %v1396, %v1394
    %v1659 = vpack.c.b16 %v1397, %v1395
    %v1660 = vpack.c.b16 %v1400, %v1398
    %v1661 = vpack.c.b16 %v1401, %v1399
    %v1662 = vpack.c.b16 %v1404, %v1402
    %v1663 = vpack.c.b16 %v1405, %v1403
    %v1664 = vpack.c.b16 %v1408, %v1406
    %v1665 = vpack.c.b16 %v1409, %v1407
    %v1666 = vpack.c.b16 %v1412, %v1410
    %v1667 = vpack.c.b16 %v1413, %v1411
    %v1668 = vpack.c.b16 %v1416, %v1414
    %v1669 = vpack.c.b16 %v1417, %v1415
    %v1670 = vpack.c.b16 %v1420, %v1418
    %v1671 = vpack.c.b16 %v1421, %v1419
    %v1672 = vpack.c.b16 %v1424, %v1422
    %v1673 = vpack.c.b16 %v1425, %v1423
    %v1674 = vpack.c.b16 %v1428, %v1426
    %v1675 = vpack.c.b16 %v1429, %v1427
    %v1676 = vpack.c.b16 %v1432, %v1430
    %v1677 = vpack.c.b16 %v1433, %v1431
    %v1678 = vpack.c.b16 %v1436, %v1434
    %v1679 = vpack.c.b16 %v1437, %v1435
    %v1680 = vpack.c.b16 %v1440, %v1438
    %v1681 = vpack.c.b16 %v1441, %v1439
    %v1682 = vpack.c.b16 %v1444, %v1442
    %v1683 = vpack.c.b16 %v1445, %v1443
    %v1684 = vpack.c.b16 %v1448, %v1446
    %v1685 = vpack.c.b16 %v1449, %v1447
    %v1686 = vpack.c.b16 %v1452, %v1450
    %v1687 = vpack.c.b16 %v1453, %v1451
    %v1688 = vpack.c.b16 %v1456, %v1454
    %v1689 = vpack.c.b16 %v1457, %v1455
    %v1690 = vpack.c.b16 %v1460, %v1458
    %v1691 = vpack.c.b16 %v1461, %v1459
    %v1692 = vpack.c.b16 %v1464, %v1462
    %v1693 = vpack.c.b16 %v1465, %v1463
    %v1694 = vpack.c.b16 %v1468, %v1466
    %v1695 = vpack.c.b16 %v1469, %v1467
    %v1696 = vpack.c.b16 %v1472, %v1470
    %v1697 = vpack.c.b16 %v1473, %v1471
    %v1698 = vpack.c.b16 %v1476, %v1474
    %v1699 = vpack.c.b16 %v1477, %v1475
    %v1700 = vpack.c.b16 %v1480, %v1478
    %v1701 = vpack.c.b16 %v1481, %v1479
    %v1702 = vpack.c.b16 %v1484, %v1482
    %v1703 = vpack.c.b16 %v1485, %v1483
    %v1704 = vpack.c.b16 %v1488, %v1486
    %v1705 = vpack.c.b16 %v1489, %v1487
    %v1706 = vpack.c.b16 %v1492, %v1490
    %v1707 = vpack.c.b16 %v1493, %v1491
    %v1708 = vpack.c.b16 %v1496, %v1494
    %v1709 = vpack.c.b16 %v1497, %v1495
    %v1710 = vpack.c.b16 %v1500, %v1498
    %v1711 = vpack.c.b16 %v1501, %v1499
    %v1712 = vpack.c.b16 %v1504, %v1502
    %v1713 = vpack.c.b16 %v1505, %v1503
    %v1714 = vpack.c.b16 %v1508, %v1506
    %v1715 = vpack.c.b16 %v1509, %v1507
    %v1716 = vpack.c.b16 %v1512, %v1510
    %v1717 = vpack.c.b16 %v1513, %v1511
    %v1718 = vpack.c.b16 %v1516, %v1514
    %v1719 = vpack.c.b16 %v1517, %v1515
    %v1720 = vpack.c.b16 %v1520, %v1518
    %v1721 = vpack.c.b16 %v1521, %v1519
    %v1722 = vpack.c.b16 %v1524, %v1522
    %v1723 = vpack.c.b16 %v1525, %v1523
    %v1724 = vpack.c.b16 %v1528, %v1526
    %v1725 = vpack.c.b16 %v1529, %v1527
    %v1726 = vpack.c.b16 %v1532, %v1530
    %v1727 = vpack.c.b16 %v1533, %v1531
    %v1728 = vpack.c.b16 %v1536, %v1534
    %v1729 = vpack.c.b16 %v1537, %v1535
    %v1730 = vpack.c.b16 %v1540, %v1538
    %v1731 = vpack.c.b16 %v1541, %v1539
    %v1732 = vpack.c.b16 %v1544, %v1542
    %v1733 = vpack.c.b16 %v1545, %v1543
    %v1734 = vpack.c.b16 %v1548, %v1546
    %v1735 = vpack.c.b16 %v1549, %v1547
    %v1736 = vpack.c.b16 %v1552, %v1550
    %v1737 = vpack.c.b16 %v1553, %v1551
    %v1738 = vpack.c.b16 %v1556, %v1554
    %v1739 = vpack.c.b16 %v1557, %v1555
    %v1740 = vpack.c.b16 %v1560, %v1558
    %v1741 = vpack.c.b16 %v1561, %v1559
    %v1742 = vpack.c.b16 %v1564, %v1562
    %v1743 = vpack.c.b16 %v1565, %v1563
    %v1744 = vpack.c.b16 %v1568, %v1566
    %v1745 = vpack.c.b16 %v1569, %v1567
    %v1746 = vpack.c.b16 %v1572, %v1570
    %v1747 = vpack.c.b16 %v1573, %v1571
    %v1748 = vpack.c.b16 %v1576, %v1574
    %v1749 = vpack.c.b16 %v1577, %v1575
    %v1750 = vpack.c.b16 %v1580, %v1578
    %v1751 = vpack.c.b16 %v1581, %v1579
    %v1752 = vpack.c.b16 %v1584, %v1582
    %v1753 = vpack.c.b16 %v1585, %v1583
    %v1754 = vpack.c.b16 %v1588, %v1586
    %v1755 = vpack.c.b16 %v1589, %v1587
    %v1756 = vpack.c.b16 %v1592, %v1590
    %v1757 = vpack.c.b16 %v1593, %v1591
    %v1758 = vpack.c.b16 %v1596, %v1594
    %v1759 = vpack.c.b16 %v1597, %v1595
    %v1760 = vpack.c.b16 %v1600, %v1598
    %v1761 = vpack.c.b16 %v1601, %v1599
    %v1762 = vpack.c.b16 %v1604, %v1602
    %v1763 = vpack.c.b16 %v1605, %v1603
    %v1764 = vpack.c.b16 %v1608, %v1606
    %v1765 = vpack.c.b16 %v1609, %v1607
    %v1766 = vpack.c.b16 %v1612, %v1610
    %v1767 = vpack.c.b16 %v1613, %v1611
    %v1768 = vpack.c.b16 %v1616, %v1614
    %v1769 = vpack.c.b16 %v1617, %v1615
    %v1770 = vpack.c.b16 %v1620, %v1618
    %v1771 = vpack.c.b16 %v1621, %v1619
    %v1772 = vpack.c.b16 %v1624, %v1622
    %v1773 = vpack.c.b16 %v1625, %v1623
    %v1774 = vpack.c.b16 %v1628, %v1626
    %v1775 = vpack.c.b16 %v1629, %v1627
    %v1776 = vpack.c.b16 %v1632, %v1630
    %v1777 = vpack.c.b16 %v1633, %v1631
    %1922 = vmatprep.subr.bf16.mxu0 %v1635
    %1923 = vmatpush1.bf16.msra.mxu0 %v1634
    %1924 = vmatprep.subr.bf16.mxu0 %v1637
    %1925 = vmatpush1.bf16.msra.mxu0 %v1636
    %1926 = vmatprep.subr.bf16.mxu0 %v1639
    %1927 = vmatpush1.bf16.msra.mxu0 %v1638
    %1928 = vmatprep.subr.bf16.mxu0 %v1641
    %1929 = vmatpush1.bf16.msra.mxu0 %v1640
    %1930 = vmatprep.subr.bf16.mxu0 %v1643
    %1931 = vmatpush1.bf16.msra.mxu0 %v1642
    %1932 = vmatprep.subr.bf16.mxu0 %v1645
    %1933 = vmatpush1.bf16.msra.mxu0 %v1644
    %1934 = vmatprep.subr.bf16.mxu0 %v1647
    %1935 = vmatpush1.bf16.msra.mxu0 %v1646
    %1936 = vmatprep.subr.bf16.mxu0 %v1649
    %1937 = vmatpush1.bf16.msra.mxu0 %v1648
    %1938 = vmatprep.subr.bf16.mxu0 %v1651
    %1939 = vmatpush1.bf16.msra.mxu0 %v1650
    %1940 = vmatprep.subr.bf16.mxu0 %v1653
    %1941 = vmatpush1.bf16.msra.mxu0 %v1652
    %1942 = vmatprep.subr.bf16.mxu0 %v1655
    %1943 = vmatpush1.bf16.msra.mxu0 %v1654
    %1944 = vmatprep.subr.bf16.mxu0 %v1657
    %1945 = vmatpush1.bf16.msra.mxu0 %v1656
    %1946 = vmatprep.subr.bf16.mxu0 %v1659
    %1947 = vmatpush1.bf16.msra.mxu0 %v1658
    %1948 = vmatprep.subr.bf16.mxu0 %v1661
    %1949 = vmatpush1.bf16.msra.mxu0 %v1660
    %1950 = vmatprep.subr.bf16.mxu0 %v1663
    %1951 = vmatpush1.bf16.msra.mxu0 %v1662
    %1952 = vmatprep.subr.bf16.mxu0 %v1665
    %1953 = vmatpush1.bf16.msra.mxu0 %v1664
    %1954 = vmatprep.mubr.bf16.mxu0 %v1038
    %1955 = vmatmul.mubr.bf16.gmra.mrb[0].mxu0 %v1037
    %v1956 = vpop.f32.mrb[0].mxu0
    %v1957 = vadd.f32 %v1195, %v1956
    %v1958 = vpop.f32.mrb[0].mxu0
    %v1959 = vadd.f32 %v1199, %v1958
    %v1960 = vpop.f32.mrb[0].mxu0
    %v1961 = vadd.f32 %v1195, %v1960
    %v1962 = vpop.f32.mrb[0].mxu0
    %v1963 = vadd.f32 %v1199, %v1962
    %1964 = vdwg.mxu0
    %1965 = vmatprep.subr.bf16.mxu0 %v1667
    %1966 = vmatpush1.bf16.msra.mxu0 %v1666
    %1967 = vmatprep.subr.bf16.mxu0 %v1669
    %1968 = vmatpush1.bf16.msra.mxu0 %v1668
    %1969 = vmatprep.subr.bf16.mxu0 %v1671
    %1970 = vmatpush1.bf16.msra.mxu0 %v1670
    %1971 = vmatprep.subr.bf16.mxu0 %v1673
    %1972 = vmatpush1.bf16.msra.mxu0 %v1672
    %1973 = vmatprep.subr.bf16.mxu0 %v1675
    %1974 = vmatpush1.bf16.msra.mxu0 %v1674
    %1975 = vmatprep.subr.bf16.mxu0 %v1677
    %1976 = vmatpush1.bf16.msra.mxu0 %v1676
    %1977 = vmatprep.subr.bf16.mxu0 %v1679
    %1978 = vmatpush1.bf16.msra.mxu0 %v1678
    %1979 = vmatprep.subr.bf16.mxu0 %v1681
    %1980 = vmatpush1.bf16.msra.mxu0 %v1680
    %1981 = vmatprep.subr.bf16.mxu0 %v1683
    %1982 = vmatpush1.bf16.msra.mxu0 %v1682
    %1983 = vmatprep.subr.bf16.mxu0 %v1685
    %1984 = vmatpush1.bf16.msra.mxu0 %v1684
    %1985 = vmatprep.subr.bf16.mxu0 %v1687
    %1986 = vmatpush1.bf16.msra.mxu0 %v1686
    %1987 = vmatprep.subr.bf16.mxu0 %v1689
    %1988 = vmatpush1.bf16.msra.mxu0 %v1688
    %1989 = vmatprep.subr.bf16.mxu0 %v1691
    %1990 = vmatpush1.bf16.msra.mxu0 %v1690
    %1991 = vmatprep.subr.bf16.mxu0 %v1693
    %1992 = vmatpush1.bf16.msra.mxu0 %v1692
    %1993 = vmatprep.subr.bf16.mxu0 %v1695
    %1994 = vmatpush1.bf16.msra.mxu0 %v1694
    %1995 = vmatprep.subr.bf16.mxu0 %v1697
    %1996 = vmatpush1.bf16.msra.mxu0 %v1696
    %1997 = vmatprep.mubr.bf16.mxu0 %v1040
    %1998 = vmatmul.mubr.bf16.gmra.mrb[0].mxu0 %v1039
    %v1999 = vpop.f32.mrb[0].mxu0
    %v2000 = vadd.f32 %v1957, %v1999
    %v2001 = vpop.f32.mrb[0].mxu0
    %v2002 = vadd.f32 %v1959, %v2001
    %v2003 = vpop.f32.mrb[0].mxu0
    %v2004 = vadd.f32 %v1961, %v2003
    %v2005 = vpop.f32.mrb[0].mxu0
    %v2006 = vadd.f32 %v1963, %v2005
    %2007 = vdwg.mxu0
    %2008 = vmatprep.subr.bf16.mxu0 %v1699
    %2009 = vmatpush1.bf16.msra.mxu0 %v1698
    %2010 = vmatprep.subr.bf16.mxu0 %v1701
    %2011 = vmatpush1.bf16.msra.mxu0 %v1700
    %2012 = vmatprep.subr.bf16.mxu0 %v1703
    %2013 = vmatpush1.bf16.msra.mxu0 %v1702
    %2014 = vmatprep.subr.bf16.mxu0 %v1705
    %2015 = vmatpush1.bf16.msra.mxu0 %v1704
    %2016 = vmatprep.subr.bf16.mxu0 %v1707
    %2017 = vmatpush1.bf16.msra.mxu0 %v1706
    %2018 = vmatprep.subr.bf16.mxu0 %v1709
    %2019 = vmatpush1.bf16.msra.mxu0 %v1708
    %2020 = vmatprep.subr.bf16.mxu0 %v1711
    %2021 = vmatpush1.bf16.msra.mxu0 %v1710
    %2022 = vmatprep.subr.bf16.mxu0 %v1713
    %2023 = vmatpush1.bf16.msra.mxu0 %v1712
    %2024 = vmatprep.subr.bf16.mxu0 %v1715
    %2025 = vmatpush1.bf16.msra.mxu0 %v1714
    %2026 = vmatprep.subr.bf16.mxu0 %v1717
    %2027 = vmatpush1.bf16.msra.mxu0 %v1716
    %2028 = vmatprep.subr.bf16.mxu0 %v1719
    %2029 = vmatpush1.bf16.msra.mxu0 %v1718
    %2030 = vmatprep.subr.bf16.mxu0 %v1721
    %2031 = vmatpush1.bf16.msra.mxu0 %v1720
    %2032 = vmatprep.subr.bf16.mxu0 %v1723
    %2033 = vmatpush1.bf16.msra.mxu0 %v1722
    %2034 = vmatprep.subr.bf16.mxu0 %v1725
    %2035 = vmatpush1.bf16.msra.mxu0 %v1724
    %2036 = vmatprep.subr.bf16.mxu0 %v1727
    %2037 = vmatpush1.bf16.msra.mxu0 %v1726
    %2038 = vmatprep.subr.bf16.mxu0 %v1729
    %2039 = vmatpush1.bf16.msra.mxu0 %v1728
    %2040 = vmatprep.mubr.bf16.mxu0 %v1042
    %2041 = vmatmul.mubr.bf16.gmra.mrb[0].mxu0 %v1041
    %v2042 = vpop.f32.mrb[0].mxu0
    %v2043 = vadd.f32 %v2000, %v2042
    %v2044 = vpop.f32.mrb[0].mxu0
    %v2045 = vadd.f32 %v2002, %v2044
    %v2046 = vpop.f32.mrb[0].mxu0
    %v2047 = vadd.f32 %v2004, %v2046
    %v2048 = vpop.f32.mrb[0].mxu0
    %v2049 = vadd.f32 %v2006, %v2048
    %2050 = vdwg.mxu0
    %2051 = vmatprep.subr.bf16.mxu0 %v1731
    %2052 = vmatpush1.bf16.msra.mxu0 %v1730
    %2053 = vmatprep.subr.bf16.mxu0 %v1733
    %2054 = vmatpush1.bf16.msra.mxu0 %v1732
    %2055 = vmatprep.subr.bf16.mxu0 %v1735
    %2056 = vmatpush1.bf16.msra.mxu0 %v1734
    %2057 = vmatprep.subr.bf16.mxu0 %v1737
    %2058 = vmatpush1.bf16.msra.mxu0 %v1736
    %2059 = vmatprep.subr.bf16.mxu0 %v1739
    %2060 = vmatpush1.bf16.msra.mxu0 %v1738
    %2061 = vmatprep.subr.bf16.mxu0 %v1741
    %2062 = vmatpush1.bf16.msra.mxu0 %v1740
    %2063 = vmatprep.subr.bf16.mxu0 %v1743
    %2064 = vmatpush1.bf16.msra.mxu0 %v1742
    %2065 = vmatprep.subr.bf16.mxu0 %v1745
    %2066 = vmatpush1.bf16.msra.mxu0 %v1744
    %2067 = vmatprep.subr.bf16.mxu0 %v1747
    %2068 = vmatpush1.bf16.msra.mxu0 %v1746
    %2069 = vmatprep.subr.bf16.mxu0 %v1749
    %2070 = vmatpush1.bf16.msra.mxu0 %v1748
    %2071 = vmatprep.subr.bf16.mxu0 %v1751
    %2072 = vmatpush1.bf16.msra.mxu0 %v1750
    %2073 = vmatprep.subr.bf16.mxu0 %v1753
    %2074 = vmatpush1.bf16.msra.mxu0 %v1752
    %2075 = vmatprep.subr.bf16.mxu0 %v1755
    %2076 = vmatpush1.bf16.msra.mxu0 %v1754
    %2077 = vmatprep.subr.bf16.mxu0 %v1757
    %2078 = vmatpush1.bf16.msra.mxu0 %v1756
    %2079 = vmatprep.subr.bf16.mxu0 %v1759
    %2080 = vmatpush1.bf16.msra.mxu0 %v1758
    %2081 = vmatprep.subr.bf16.mxu0 %v1761
    %2082 = vmatpush1.bf16.msra.mxu0 %v1760
    %2083 = vmatprep.mubr.bf16.mxu0 %v1044
    %2084 = vmatmul.mubr.bf16.gmra.mrb[0].mxu0 %v1043
    %v2085 = vpop.f32.mrb[0].mxu0
    %v2086 = vadd.f32 %v2043, %v2085
    %v2087 = vpop.f32.mrb[0].mxu0
    %v2088 = vadd.f32 %v2045, %v2087
    %v2089 = vpop.f32.mrb[0].mxu0
    %v2090 = vadd.f32 %v2047, %v2089
    %v2091 = vpop.f32.mrb[0].mxu0
    %v2092 = vadd.f32 %v2049, %v2091
    %2093 = vdwg.mxu0
    %2094 = vmatprep.subr.bf16.mxu0 %v1763
    %2095 = vmatpush1.bf16.msra.mxu0 %v1762
    %2096 = vmatprep.subr.bf16.mxu0 %v1765
    %2097 = vmatpush1.bf16.msra.mxu0 %v1764
    %2098 = vmatprep.subr.bf16.mxu0 %v1767
    %2099 = vmatpush1.bf16.msra.mxu0 %v1766
    %2100 = vmatprep.subr.bf16.mxu0 %v1769
    %2101 = vmatpush1.bf16.msra.mxu0 %v1768
    %2102 = vmatprep.subr.bf16.mxu0 %v1771
    %2103 = vmatpush1.bf16.msra.mxu0 %v1770
    %2104 = vmatprep.subr.bf16.mxu0 %v1773
    %2105 = vmatpush1.bf16.msra.mxu0 %v1772
    %2106 = vmatprep.subr.bf16.mxu0 %v1775
    %2107 = vmatpush1.bf16.msra.mxu0 %v1774
    %2108 = vmatprep.subr.bf16.mxu0 %v1777
    %2109 = vmatpush1.bf16.msra.mxu0 %v1776
    %2110 = vmatprep.subr.bf16.mxu0 0
    %2111 = vmatpush1.bf16.msra.mxu0 0
    %2112 = vmatprep.subr.bf16.mxu0 0
    %2113 = vmatpush1.bf16.msra.mxu0 0
    %2114 = vmatprep.subr.bf16.mxu0 0
    %2115 = vmatpush1.bf16.msra.mxu0 0
    %2116 = vmatprep.subr.bf16.mxu0 0
    %2117 = vmatpush1.bf16.msra.mxu0 0
    %2118 = vmatprep.subr.bf16.mxu0 0
    %2119 = vmatpush1.bf16.msra.mxu0 0
    %2120 = vmatprep.subr.bf16.mxu0 0
    %2121 = vmatpush1.bf16.msra.mxu0 0
    %2122 = vmatprep.subr.bf16.mxu0 0
    %2123 = vmatpush1.bf16.msra.mxu0 0
    %2124 = vmatprep.subr.bf16.mxu0 0
    %2125 = vmatpush1.bf16.msra.mxu0 0
    %2126 = vmatprep.mubr.bf16.mxu0 0
    %2127 = vmatmul.mubr.bf16.gmra.mrb[0].mxu0 %v1045
    %v2128 = vpop.f32.mrb[0].mxu0
    %v2129 = vadd.f32 %v2086, %v2128
    %v2130 = vpop.f32.mrb[0].mxu0
    %v2131 = vadd.f32 %v2088, %v2130
    %v2132 = vpop.f32.mrb[0].mxu0
    %v2133 = vadd.f32 %v2090, %v2132
    %v2134 = vpop.f32.mrb[0].mxu0
    %v2135 = vadd.f32 %v2092, %v2134
    %2136 = vdwg.mxu0
    %v2137 = vmax.f32 %v2129, 0.0
    %v2138 = vmax.f32 %v2133, 0.0
    %v2139 = vxor.u32 %v2131, 2147483648
    %v2140 = vxor.u32 %v2135, 2147483648
    %v2141 = vmul.f32 %v2139, 1.442695
    %v2142 = vpow.pop %v2141
    %v2143 = vmul.f32 %v2140, 1.442695
    %v2144 = vpow.pop %v2143
    %v2145 = vadd.f32 %v2142, 1.0
    %v2146 = vadd.f32 %v2144, 1.0
    %v2147 = vrcp.pop %v2145
    %v2148 = vmul.f32 1.0, %v2147
    %v2149 = vrcp.pop %v2146
    %v2150 = vmul.f32 1.0, %v2149
    %2151 = vst [vmem:[#allocation10] sm:$0xff] %v2137
    %2152 = vst [vmem:[#allocation10 + $0x10] sm:$0xff] %v2138
    %2153 = vst [vmem:[#allocation10 + $0x8] sm:$0xff] %v2148
    %2154 = vst [vmem:[#allocation10 + $0x18] sm:$0xff] %v2150
    // Predicated region
    $region38: #{tpu_custom_call.1} parent=1 // pred_check
      _
    $region39: #{tpu_custom_call.1} parent=1 // pred_check_branch
      %2156 = sbr.rel (0) target = $region41
    $region40: #{tpu_custom_call.1} parent=1 // pred_region
      %s2158 = ssub.s32 512, 512
      %2159 = vsyncadd [#allocation4], %s2158
      %s2160 = sshll.u32 [#allocation10], 4
      %s2161 = int_to_ptr.vmem [resolvable:$true] %s2160
      %2166 = dma.vmem_to_hbm [thread:$0]  %s2161, 512, %s5, [#allocation4], 256, 256, 16
    $region41: #{tpu_custom_call.1} parent=1 // pred_fallthru
      _
    // Predicated region
    $region42: #{tpu_custom_call.1} parent=1 // pred_check
      _
    $region43: #{tpu_custom_call.1} parent=1 // pred_check_branch
      %2168 = sbr.rel (0) target = $region45
    $region44: #{tpu_custom_call.1} parent=1 // pred_region
      %2169 = dma.done [#allocation4], 512
    $region45: #{tpu_custom_call.1} parent=1 // pred_fallthru
      _
    %2170 = vsyncpa [#allocation3], 1
    %2171 = vsyncpa [#allocation6], 1
    %2172 = vsyncpa [#allocation9], 1
    %2173 = vsyncpa [#allocation4], 1

</llo_original>
